<compile_context>
chip_gen: v7x
topology: tpu7x:2x2x1
jax: 0.10.0
libtpu: 0.0.40
codegen_flags: <defaults>
</compile_context>

<pallas_src>
import jax
import jax.numpy as jnp
from jax.experimental import pallas as pl
from jax.experimental.pallas import tpu as pltpu

SELU_ALPHA = 1.6732632423543772
SELU_SCALE = 1.0507009873554805
BN_EPS = 1e-5

# target number of matmul columns (rows of the image * W) per row strip in pass 1
_IM2COL_COLS_TARGET = 4096
# cap on the pass-2 lane tile (HBM-bound elementwise pass wants 512+ lanes)
_BN_TILE_CAP = 4096
# fits inside v7x's 64 MiB physical VMEM; generous headroom on v5e/v6e (128 MiB)
_VMEM_CAP_BYTES = 48 * 1024 * 1024


def conv_stats_kernel(x_ref, w_ref, y_ref, sum_ref, sq_ref, xp_ref):
    # x_ref   : (1, Cin, H, W)   one image, NCHW (small Cin never on the lane axis)
    # w_ref   : (Cout, 9*Cin)    conv weight packed as k = (kh*3 + kw)*Cin + ci
    # y_ref   : (1, Cout, H*W)   conv output, channel-major (lane-dense store)
    # sum_ref : (1, Cout, 1)     per-image per-channel sum of conv output
    # sq_ref  : (1, Cout, 1)     per-image per-channel sum of squares
    # xp_ref  : (Cin, H+2, W+2)  VMEM scratch: zero-padded copy of the image
    _, Cin, H, W = x_ref.shape
    Cout = y_ref.shape[1]
    Hp, Wp = H + 2, W + 2

    # Zero only the 1-pixel halo strips (the interior is fully overwritten right
    # below); re-done every grid step so it is safe under megacore sharding.
    xp_ref[:, 0:1, :] = jnp.zeros((Cin, 1, Wp), jnp.float32)
    xp_ref[:, Hp - 1:Hp, :] = jnp.zeros((Cin, 1, Wp), jnp.float32)
    xp_ref[:, :, 0:1] = jnp.zeros((Cin, Hp, 1), jnp.float32)
    xp_ref[:, :, Wp - 1:Wp] = jnp.zeros((Cin, Hp, 1), jnp.float32)
    xp_ref[:, 1:H + 1, 1:W + 1] = x_ref[0].astype(jnp.float32)

    # Row-strip tiling of the M (= H*W) dimension keeps the im2col slab and the
    # matmul result small for big images; at demo sizes this is a single strip.
    TH = max(1, min(H, _IM2COL_COLS_TARGET // max(W, 1)))

    s = jnp.zeros((Cout, 1), jnp.float32)
    sq = jnp.zeros((Cout, 1), jnp.float32)
    for h0 in range(0, H, TH):
        th = min(TH, H - h0)
        # Pack all 9 taps into one K = 9*Cin contraction: a single MXU matmul
        # instead of 9 skinny K=Cin dots plus 8 VPU accumulate passes.
        taps = []
        for kh in range(3):
            for kw in range(3):
                win = xp_ref[:, h0 + kh:h0 + kh + th, kw:kw + W]      # (Cin, th, W)
                taps.append(win.reshape(Cin, th * W))
        patches = jnp.concatenate(taps, axis=0)                       # (9*Cin, th*W)
        # Weights as LHS -> result is already (Cout, th*W): no XLU transpose and
        # the store is lane-dense (H*W a multiple of 128 for realistic shapes).
        acc = jnp.dot(w_ref[...], patches, preferred_element_type=jnp.float32)
        y_ref[0, :, h0 * W:(h0 + th) * W] = acc
        # Per-strip BN partials, accumulated in f32.
        s = s + jnp.sum(acc, axis=1, keepdims=True)
        sq = sq + jnp.sum(acc * acc, axis=1, keepdims=True)

    # Tiny per-image partials; finalized across N in the wrapper.
    sum_ref[0] = s
    sq_ref[0] = sq


def bn_selu_kernel(y_ref, scale_ref, shift_ref, o_ref):
    # y_ref, o_ref : (1, Cout, T)  lane-dense tiles of the conv output (aliased in place)
    # scale_ref    : (Cout, 1)     gamma * rsqrt(var + eps)
    # shift_ref    : (Cout, 1)     beta - mean * scale
    z = y_ref[...] * scale_ref[...] + shift_ref[...]
    # SELU; exp argument clamped to <= 0 so no inf intermediates are produced.
    neg = SELU_ALPHA * (jnp.exp(jnp.minimum(z, 0.0)) - 1.0)
    o_ref[...] = (SELU_SCALE * jnp.where(z > 0.0, z, neg)).astype(o_ref.dtype)


def _pick_hw_tile(hw, cap=_BN_TILE_CAP):
    """Largest multiple-of-128 divisor of hw that is <= cap (lane-dense tiles,
    few grid steps for the HBM-bound BN+SELU pass); fall back to the full row."""
    if hw % 128 != 0:
        return hw
    best = 128
    t = 128
    while t <= min(hw, cap):
        if hw % t == 0:
            best = t
        t += 128
    return best


def conv_bn_relu_forward(x_nchw, weight_oihw, bias, gamma, beta):
    """x_nchw: (N, Cin, H, W) float32. Returns (N, Cout, H, W) float32."""
    N, Cin, H, W = x_nchw.shape
    Cout = weight_oihw.shape[0]
    HW = H * W

    # Training-mode BatchNorm subtracts the per-channel batch mean, which cancels
    # the conv bias exactly -> skip the bias add, its input stream and its DMA.
    del bias

    # Pack the weights once: (O, Cin, 3, 3) -> (O, kh, kw, ci) -> (Cout, 9*Cin).
    w_packed = jnp.transpose(weight_oihw, (0, 2, 3, 1)).reshape(Cout, 9 * Cin)
    w_packed = w_packed.astype(jnp.float32)

    conv_cost = pl.CostEstimate(
        flops=2 * N * HW * 9 * Cin * Cout,
        transcendentals=0,
        bytes_accessed=4 * (N * HW * Cin + 9 * Cin * Cout
                            + N * Cout * HW + 2 * N * Cout))

    y_flat, ysum, ysq = pl.pallas_call(
        conv_stats_kernel,
        out_shape=(
            jax.ShapeDtypeStruct((N, Cout, HW), jnp.float32),
            jax.ShapeDtypeStruct((N, Cout, 1), jnp.float32),
            jax.ShapeDtypeStruct((N, Cout, 1), jnp.float32),
        ),
        grid_spec=pltpu.PrefetchScalarGridSpec(
            num_scalar_prefetch=0,
            grid=(N,),
            in_specs=[
                pl.BlockSpec((1, Cin, H, W), lambda n: (n, 0, 0, 0)),
                pl.BlockSpec((Cout, 9 * Cin), lambda n: (0, 0)),
            ],
            out_specs=(
                pl.BlockSpec((1, Cout, HW), lambda n: (n, 0, 0)),
                pl.BlockSpec((1, Cout, 1), lambda n: (n, 0, 0)),
                pl.BlockSpec((1, Cout, 1), lambda n: (n, 0, 0)),
            ),
            scratch_shapes=[pltpu.VMEM((Cin, H + 2, W + 2), jnp.float32)],
        ),
        compiler_params=pltpu.CompilerParams(
            dimension_semantics=("parallel",),
            vmem_limit_bytes=_VMEM_CAP_BYTES),
        cost_estimate=conv_cost,
    )(x_nchw.astype(jnp.float32), w_packed)

    # Finalize BatchNorm2d training-mode statistics (batch mean, biased variance)
    # from the tiny per-image partials, folded into per-channel scale/shift.
    # TODO(synk): E[x^2]-E[x]^2 in f32 can cancel for large-magnitude activations;
    # switch to a centered second pass if that regime matters.
    cnt = jnp.float32(N * HW)
    mean = jnp.sum(ysum, axis=(0, 2)) / cnt                          # (Cout,)
    var = jnp.maximum(jnp.sum(ysq, axis=(0, 2)) / cnt - mean * mean, 0.0)
    scale = gamma.astype(jnp.float32) * jax.lax.rsqrt(var + BN_EPS)
    shift = beta.astype(jnp.float32) - mean * scale

    T = _pick_hw_tile(HW)                                            # large lane-dense tile
    bn_cost = pl.CostEstimate(
        flops=5 * N * Cout * HW,
        transcendentals=N * Cout * HW,
        bytes_accessed=4 * (2 * N * Cout * HW + 2 * Cout))

    out_flat = pl.pallas_call(
        bn_selu_kernel,
        out_shape=jax.ShapeDtypeStruct((N, Cout, HW), jnp.float32),
        grid_spec=pltpu.PrefetchScalarGridSpec(
            num_scalar_prefetch=0,
            grid=(N, HW // T),
            in_specs=[
                pl.BlockSpec((1, Cout, T), lambda n, t: (n, 0, t)),
                pl.BlockSpec((Cout, 1), lambda n, t: (0, 0)),
                pl.BlockSpec((Cout, 1), lambda n, t: (0, 0)),
            ],
            out_specs=pl.BlockSpec((1, Cout, T), lambda n, t: (n, 0, t)),
        ),
        compiler_params=pltpu.CompilerParams(
            dimension_semantics=("parallel", "parallel"),
            vmem_limit_bytes=_VMEM_CAP_BYTES),
        cost_estimate=bn_cost,
        input_output_aliases={0: 0},   # BN+SELU in place over the conv intermediate
    )(y_flat, scale.reshape(Cout, 1), shift.reshape(Cout, 1))

    # (N, Cout, H*W) is already NCHW memory order — a free reshape, no transpose.
    return out_flat.reshape(N, Cout, H, W)


def _reference(x_nchw, weight_oihw, bias, gamma, beta):
    # plain-JAX reference (conv + bias + training-mode BN + SELU)
    y = jax.lax.conv_general_dilated(
        x_nchw, weight_oihw, window_strides=(1, 1), padding=((1, 1), (1, 1)),
        dimension_numbers=("NCHW", "OIHW", "NCHW"))
    y = y + bias.reshape(1, -1, 1, 1)
    mean = jnp.mean(y, axis=(0, 2, 3), keepdims=True)
    var = jnp.mean((y - mean) ** 2, axis=(0, 2, 3), keepdims=True)
    y = (y - mean) / jnp.sqrt(var + BN_EPS)
    y = y * gamma.reshape(1, -1, 1, 1) + beta.reshape(1, -1, 1, 1)
    return SELU_SCALE * (jnp.maximum(y, 0.0)
                         + jnp.minimum(0.0, SELU_ALPHA * (jnp.exp(y) - 1.0)))


if __name__ == "__main__":
    key = jax.random.PRNGKey(0)
    k_x, k_w, k_b, k_g, k_beta = jax.random.split(key, 5)

    N, Cin, Cout, H, W = 2, 4, 8, 16, 16

    x = jax.random.normal(k_x, (N, Cin, H, W), dtype=jnp.float32)
    # deterministic synthetic parameters (shapes per nn.Conv2d / nn.BatchNorm2d)
    weight = 0.1 * jax.random.normal(k_w, (Cout, Cin, 3, 3), dtype=jnp.float32)
    bias = 0.1 * jax.random.normal(k_b, (Cout,), dtype=jnp.float32)
    gamma = 1.0 + 0.05 * jax.random.normal(k_g, (Cout,), dtype=jnp.float32)
    beta = 0.05 * jax.random.normal(k_beta, (Cout,), dtype=jnp.float32)

    fwd = jax.jit(conv_bn_relu_forward)
    out = fwd(x, weight, bias, gamma, beta)
    out = jax.block_until_ready(out)

    ref = _reference(x, weight, bias, gamma, beta)
    assert out.shape == (N, Cout, H, W)
    assert jnp.max(jnp.abs(out - ref)) < 2e-3

    print("KERNEL_OK")
</pallas_src>

<mosaic_0001>
module attributes {stable_mosaic.version = 11 : i64} {
  func.func @conv_stats_kernel(%arg0: i32, %arg1: memref<1x4x16x16xf32, #tpu.memory_space<vmem>>, %arg2: memref<8x36xf32, #tpu.memory_space<vmem>>, %arg3: memref<1x8x256xf32, #tpu.memory_space<vmem>>, %arg4: memref<1x8x1xf32, #tpu.memory_space<vmem>>, %arg5: memref<1x8x1xf32, #tpu.memory_space<vmem>>, %arg6: memref<4x18x18xf32, #tpu.memory_space<vmem>>) attributes {dimension_semantics = [#tpu.dimension_semantics<parallel>], iteration_bounds = array<i64: 2>, scalar_prefetch = 0 : i64, scratch_operands = 1 : i64, tpu.core_type = #tpu.core_type<tc>, window_params = [{transform_indices = @transform_0, window_bounds = array<i64: 1, 4, 16, 16>}, {pipeline_mode = #tpu.pipeline_mode<synchronous>, transform_indices = @transform_1, window_bounds = array<i64: 8, 36>}, {transform_indices = @transform_2, window_bounds = array<i64: 1, 8, 256>}, {transform_indices = @transform_3, window_bounds = array<i64: 1, 8, 1>}, {transform_indices = @transform_4, window_bounds = array<i64: 1, 8, 1>}]} {
    %cst = arith.constant 0.000000e+00 : f32
    %0 = vector.broadcast %cst : f32 to vector<4x1x18xf32>
    %c0 = arith.constant 0 : index
    %c0_0 = arith.constant 0 : index
    %c0_1 = arith.constant 0 : index
    %1 = vector.load %arg6[%c0, %c0_0, %c0_1] : memref<4x18x18xf32, #tpu.memory_space<vmem>>, vector<4x1x18xf32>
    tpu.vector_store %arg6[%c0, %c0_0, %c0_1], %0 {strides = array<i32>} : memref<4x18x18xf32, #tpu.memory_space<vmem>>, vector<4x1x18xf32>,
    %cst_2 = arith.constant 0.000000e+00 : f32
    %2 = vector.broadcast %cst_2 : f32 to vector<4x1x18xf32>
    %c0_3 = arith.constant 0 : index
    %c17 = arith.constant 17 : index
    %c0_4 = arith.constant 0 : index
    %3 = vector.load %arg6[%c0_3, %c17, %c0_4] : memref<4x18x18xf32, #tpu.memory_space<vmem>>, vector<4x1x18xf32>
    tpu.vector_store %arg6[%c0_3, %c17, %c0_4], %2 {strides = array<i32>} : memref<4x18x18xf32, #tpu.memory_space<vmem>>, vector<4x1x18xf32>,
    %cst_5 = arith.constant 0.000000e+00 : f32
    %4 = vector.broadcast %cst_5 : f32 to vector<4x18x1xf32>
    %c0_6 = arith.constant 0 : index
    %c0_7 = arith.constant 0 : index
    %c0_8 = arith.constant 0 : index
    %5 = vector.load %arg6[%c0_6, %c0_7, %c0_8] : memref<4x18x18xf32, #tpu.memory_space<vmem>>, vector<4x18x1xf32>
    tpu.vector_store %arg6[%c0_6, %c0_7, %c0_8], %4 {strides = array<i32>} : memref<4x18x18xf32, #tpu.memory_space<vmem>>, vector<4x18x1xf32>,
    %cst_9 = arith.constant 0.000000e+00 : f32
    %6 = vector.broadcast %cst_9 : f32 to vector<4x18x1xf32>
    %c0_10 = arith.constant 0 : index
    %c0_11 = arith.constant 0 : index
    %c17_12 = arith.constant 17 : index
    %7 = vector.load %arg6[%c0_10, %c0_11, %c17_12] : memref<4x18x18xf32, #tpu.memory_space<vmem>>, vector<4x18x1xf32>
    tpu.vector_store %arg6[%c0_10, %c0_11, %c17_12], %6 {strides = array<i32>} : memref<4x18x18xf32, #tpu.memory_space<vmem>>, vector<4x18x1xf32>,
    %c0_13 = arith.constant 0 : index
    %c0_14 = arith.constant 0 : index
    %c0_15 = arith.constant 0 : index
    %c0_16 = arith.constant 0 : index
    %8 = vector.load %arg1[%c0_13, %c0_14, %c0_15, %c0_16] : memref<1x4x16x16xf32, #tpu.memory_space<vmem>>, vector<1x4x16x16xf32>
    %9 = vector.shape_cast %8 : vector<1x4x16x16xf32> to vector<4x16x16xf32>
    %c0_17 = arith.constant 0 : index
    %c1 = arith.constant 1 : index
    %c1_18 = arith.constant 1 : index
    %10 = vector.load %arg6[%c0_17, %c1, %c1_18] : memref<4x18x18xf32, #tpu.memory_space<vmem>>, vector<4x16x16xf32>
    tpu.vector_store %arg6[%c0_17, %c1, %c1_18], %9 {strides = array<i32>} : memref<4x18x18xf32, #tpu.memory_space<vmem>>, vector<4x16x16xf32>,
    %cst_19 = arith.constant 0.000000e+00 : f32
    %11 = vector.broadcast %cst_19 : f32 to vector<8x1xf32>
    %cst_20 = arith.constant 0.000000e+00 : f32
    %12 = vector.broadcast %cst_20 : f32 to vector<8x1xf32>
    %c0_21 = arith.constant 0 : index
    %c0_22 = arith.constant 0 : index
    %c0_23 = arith.constant 0 : index
    %13 = vector.load %arg6[%c0_21, %c0_22, %c0_23] : memref<4x18x18xf32, #tpu.memory_space<vmem>>, vector<4x16x16xf32>
    %14 = vector.shape_cast %13 : vector<4x16x16xf32> to vector<4x256xf32>
    %c0_24 = arith.constant 0 : index
    %c0_25 = arith.constant 0 : index
    %c1_26 = arith.constant 1 : index
    %15 = vector.load %arg6[%c0_24, %c0_25, %c1_26] : memref<4x18x18xf32, #tpu.memory_space<vmem>>, vector<4x16x16xf32>
    %16 = vector.shape_cast %15 : vector<4x16x16xf32> to vector<4x256xf32>
    %c0_27 = arith.constant 0 : index
    %c0_28 = arith.constant 0 : index
    %c2 = arith.constant 2 : index
    %17 = vector.load %arg6[%c0_27, %c0_28, %c2] : memref<4x18x18xf32, #tpu.memory_space<vmem>>, vector<4x16x16xf32>
    %18 = vector.shape_cast %17 : vector<4x16x16xf32> to vector<4x256xf32>
    %c0_29 = arith.constant 0 : index
    %c1_30 = arith.constant 1 : index
    %c0_31 = arith.constant 0 : index
    %19 = vector.load %arg6[%c0_29, %c1_30, %c0_31] : memref<4x18x18xf32, #tpu.memory_space<vmem>>, vector<4x16x16xf32>
    %20 = vector.shape_cast %19 : vector<4x16x16xf32> to vector<4x256xf32>
    %c0_32 = arith.constant 0 : index
    %c1_33 = arith.constant 1 : index
    %c1_34 = arith.constant 1 : index
    %21 = vector.load %arg6[%c0_32, %c1_33, %c1_34] : memref<4x18x18xf32, #tpu.memory_space<vmem>>, vector<4x16x16xf32>
    %22 = vector.shape_cast %21 : vector<4x16x16xf32> to vector<4x256xf32>
    %c0_35 = arith.constant 0 : index
    %c1_36 = arith.constant 1 : index
    %c2_37 = arith.constant 2 : index
    %23 = vector.load %arg6[%c0_35, %c1_36, %c2_37] : memref<4x18x18xf32, #tpu.memory_space<vmem>>, vector<4x16x16xf32>
    %24 = vector.shape_cast %23 : vector<4x16x16xf32> to vector<4x256xf32>
    %c0_38 = arith.constant 0 : index
    %c2_39 = arith.constant 2 : index
    %c0_40 = arith.constant 0 : index
    %25 = vector.load %arg6[%c0_38, %c2_39, %c0_40] : memref<4x18x18xf32, #tpu.memory_space<vmem>>, vector<4x16x16xf32>
    %26 = vector.shape_cast %25 : vector<4x16x16xf32> to vector<4x256xf32>
    %c0_41 = arith.constant 0 : index
    %c2_42 = arith.constant 2 : index
    %c1_43 = arith.constant 1 : index
    %27 = vector.load %arg6[%c0_41, %c2_42, %c1_43] : memref<4x18x18xf32, #tpu.memory_space<vmem>>, vector<4x16x16xf32>
    %28 = vector.shape_cast %27 : vector<4x16x16xf32> to vector<4x256xf32>
    %c0_44 = arith.constant 0 : index
    %c2_45 = arith.constant 2 : index
    %c2_46 = arith.constant 2 : index
    %29 = vector.load %arg6[%c0_44, %c2_45, %c2_46] : memref<4x18x18xf32, #tpu.memory_space<vmem>>, vector<4x16x16xf32>
    %30 = vector.shape_cast %29 : vector<4x16x16xf32> to vector<4x256xf32>
    %31 = tpu.concatenate %14, %16, %18, %20, %22, %24, %26, %28, %30 in 0 : vector<4x256xf32>, vector<4x256xf32>, vector<4x256xf32>, vector<4x256xf32>, vector<4x256xf32>, vector<4x256xf32>, vector<4x256xf32>, vector<4x256xf32>, vector<4x256xf32> -> vector<36x256xf32>
    %c0_47 = arith.constant 0 : index
    %c0_48 = arith.constant 0 : index
    %32 = vector.load %arg2[%c0_47, %c0_48] : memref<8x36xf32, #tpu.memory_space<vmem>>, vector<8x36xf32>
    %cst_49 = arith.constant dense<0.000000e+00> : vector<8x256xf32>
    %33 = tpu.matmul %32, %31, %cst_49 {dimension_numbers = #tpu.dot_dimension_numbers<[1], [0], [0], [1], [0, 0, 1, 1], [], []>} : vector<8x36xf32>, vector<36x256xf32>, vector<8x256xf32> -> vector<8x256xf32>
    %c0_50 = arith.constant 0 : index
    %c0_51 = arith.constant 0 : index
    %c0_52 = arith.constant 0 : index
    %34 = vector.load %arg3[%c0_50, %c0_51, %c0_52] : memref<1x8x256xf32, #tpu.memory_space<vmem>>, vector<1x8x256xf32>
    %35 = vector.shape_cast %34 : vector<1x8x256xf32> to vector<8x256xf32>
    %36 = vector.shape_cast %33 : vector<8x256xf32> to vector<1x8x256xf32>
    tpu.vector_store %arg3[%c0_50, %c0_51, %c0_52], %36 {strides = array<i32>} : memref<1x8x256xf32, #tpu.memory_space<vmem>>, vector<1x8x256xf32>,
    %cst_53 = arith.constant dense<0.000000e+00> : vector<8xf32>
    %37 = vector.multi_reduction <add>, %33, %cst_53 [1] : vector<8x256xf32> to vector<8xf32>
    %38 = vector.shape_cast %37 : vector<8xf32> to vector<8x1xf32>
    %39 = arith.addf %11, %38 : vector<8x1xf32>
    %40 = arith.mulf %33, %33 : vector<8x256xf32>
    %cst_54 = arith.constant dense<0.000000e+00> : vector<8xf32>
    %41 = vector.multi_reduction <add>, %40, %cst_54 [1] : vector<8x256xf32> to vector<8xf32>
    %42 = vector.shape_cast %41 : vector<8xf32> to vector<8x1xf32>
    %43 = arith.addf %12, %42 : vector<8x1xf32>
    %c0_55 = arith.constant 0 : index
    %c0_56 = arith.constant 0 : index
    %c0_57 = arith.constant 0 : index
    %44 = vector.load %arg4[%c0_55, %c0_56, %c0_57] : memref<1x8x1xf32, #tpu.memory_space<vmem>>, vector<1x8x1xf32>
    %45 = vector.shape_cast %44 : vector<1x8x1xf32> to vector<8x1xf32>
    %46 = vector.shape_cast %39 : vector<8x1xf32> to vector<1x8x1xf32>
    tpu.vector_store %arg4[%c0_55, %c0_56, %c0_57], %46 {strides = array<i32>} : memref<1x8x1xf32, #tpu.memory_space<vmem>>, vector<1x8x1xf32>,
    %c0_58 = arith.constant 0 : index
    %c0_59 = arith.constant 0 : index
    %c0_60 = arith.constant 0 : index
    %47 = vector.load %arg5[%c0_58, %c0_59, %c0_60] : memref<1x8x1xf32, #tpu.memory_space<vmem>>, vector<1x8x1xf32>
    %48 = vector.shape_cast %47 : vector<1x8x1xf32> to vector<8x1xf32>
    %49 = vector.shape_cast %43 : vector<8x1xf32> to vector<1x8x1xf32>
    tpu.vector_store %arg5[%c0_58, %c0_59, %c0_60], %49 {strides = array<i32>} : memref<1x8x1xf32, #tpu.memory_space<vmem>>, vector<1x8x1xf32>,
    return
  }
  func.func @transform_0(%arg0: i32) -> (i32, i32, i32, i32) {
    %c0_i32 = arith.constant 0 : i32
    %c0_i32_0 = arith.constant 0 : i32
    %c0_i32_1 = arith.constant 0 : i32
    %c0_i32_2 = arith.constant 0 : i32
    return %arg0, %c0_i32, %c0_i32_0, %c0_i32_1 : i32, i32, i32, i32
  }
  func.func @transform_1(%arg0: i32) -> (i32, i32) {
    %c0_i32 = arith.constant 0 : i32
    %c0_i32_0 = arith.constant 0 : i32
    %c0_i32_1 = arith.constant 0 : i32
    return %c0_i32, %c0_i32_0 : i32, i32
  }
  func.func @transform_2(%arg0: i32) -> (i32, i32, i32) {
    %c0_i32 = arith.constant 0 : i32
    %c0_i32_0 = arith.constant 0 : i32
    %c0_i32_1 = arith.constant 0 : i32
    return %arg0, %c0_i32, %c0_i32_0 : i32, i32, i32
  }
  func.func @transform_3(%arg0: i32) -> (i32, i32, i32) {
    %c0_i32 = arith.constant 0 : i32
    %c0_i32_0 = arith.constant 0 : i32
    %c0_i32_1 = arith.constant 0 : i32
    return %arg0, %c0_i32, %c0_i32_0 : i32, i32, i32
  }
  func.func @transform_4(%arg0: i32) -> (i32, i32, i32) {
    %c0_i32 = arith.constant 0 : i32
    %c0_i32_0 = arith.constant 0 : i32
    %c0_i32_1 = arith.constant 0 : i32
    return %arg0, %c0_i32, %c0_i32_0 : i32, i32, i32
  }
}

module attributes {stable_mosaic.version = 11 : i64} {
  func.func @bn_selu_kernel(%arg0: i32, %arg1: i32, %arg2: memref<1x8x256xf32, #tpu.memory_space<vmem>>, %arg3: memref<8x1xf32, #tpu.memory_space<vmem>>, %arg4: memref<8x1xf32, #tpu.memory_space<vmem>>, %arg5: memref<1x8x256xf32, #tpu.memory_space<vmem>>) attributes {dimension_semantics = [#tpu.dimension_semantics<parallel>, #tpu.dimension_semantics<parallel>], iteration_bounds = array<i64: 2, 1>, scalar_prefetch = 0 : i64, scratch_operands = 0 : i64, tpu.core_type = #tpu.core_type<tc>, window_params = [{transform_indices = @transform_0, window_bounds = array<i64: 1, 8, 256>}, {pipeline_mode = #tpu.pipeline_mode<synchronous>, transform_indices = @transform_1, window_bounds = array<i64: 8, 1>}, {pipeline_mode = #tpu.pipeline_mode<synchronous>, transform_indices = @transform_2, window_bounds = array<i64: 8, 1>}, {transform_indices = @transform_3, window_bounds = array<i64: 1, 8, 256>}]} {
    %c0 = arith.constant 0 : index
    %c0_0 = arith.constant 0 : index
    %c0_1 = arith.constant 0 : index
    %0 = vector.load %arg2[%c0, %c0_0, %c0_1] : memref<1x8x256xf32, #tpu.memory_space<vmem>>, vector<1x8x256xf32>
    %c0_2 = arith.constant 0 : index
    %c0_3 = arith.constant 0 : index
    %1 = vector.load %arg3[%c0_2, %c0_3] : memref<8x1xf32, #tpu.memory_space<vmem>>, vector<8x1xf32>
    %2 = vector.shape_cast %1 : vector<8x1xf32> to vector<1x8x1xf32>
    %3 = vector.broadcast %2 : vector<1x8x1xf32> to vector<1x8x256xf32>
    %4 = arith.mulf %0, %3 : vector<1x8x256xf32>
    %c0_4 = arith.constant 0 : index
    %c0_5 = arith.constant 0 : index
    %5 = vector.load %arg4[%c0_4, %c0_5] : memref<8x1xf32, #tpu.memory_space<vmem>>, vector<8x1xf32>
    %6 = vector.shape_cast %5 : vector<8x1xf32> to vector<1x8x1xf32>
    %7 = vector.broadcast %6 : vector<1x8x1xf32> to vector<1x8x256xf32>
    %8 = arith.addf %4, %7 : vector<1x8x256xf32>
    %cst = arith.constant 0.000000e+00 : f32
    %9 = vector.broadcast %cst : f32 to vector<1x8x256xf32>
    %10 = arith.minimumf %8, %9 : vector<1x8x256xf32>
    %11 = math.exp %10 : vector<1x8x256xf32>
    %cst_6 = arith.constant 1.000000e+00 : f32
    %12 = vector.broadcast %cst_6 : f32 to vector<1x8x256xf32>
    %13 = arith.subf %11, %12 : vector<1x8x256xf32>
    %cst_7 = arith.constant 1.67326319 : f32
    %14 = vector.broadcast %cst_7 : f32 to vector<1x8x256xf32>
    %15 = arith.mulf %14, %13 : vector<1x8x256xf32>
    %cst_8 = arith.constant 0.000000e+00 : f32
    %16 = vector.broadcast %cst_8 : f32 to vector<1x8x256xf32>
    %17 = arith.cmpf ogt, %8, %16 : vector<1x8x256xf32>
    %18 = arith.select %17, %8, %15 : vector<1x8x256xi1>, vector<1x8x256xf32>
    %cst_9 = arith.constant 1.05070102 : f32
    %19 = vector.broadcast %cst_9 : f32 to vector<1x8x256xf32>
    %20 = arith.mulf %19, %18 : vector<1x8x256xf32>
    %c0_10 = arith.constant 0 : index
    %c0_11 = arith.constant 0 : index
    %c0_12 = arith.constant 0 : index
    %21 = vector.load %arg5[%c0_10, %c0_11, %c0_12] : memref<1x8x256xf32, #tpu.memory_space<vmem>>, vector<1x8x256xf32>
    tpu.vector_store %arg5[%c0_10, %c0_11, %c0_12], %20 {strides = array<i32>} : memref<1x8x256xf32, #tpu.memory_space<vmem>>, vector<1x8x256xf32>,
    return
  }
  func.func @transform_0(%arg0: i32, %arg1: i32) -> (i32, i32, i32) {
    %c0_i32 = arith.constant 0 : i32
    %c0_i32_0 = arith.constant 0 : i32
    return %arg0, %c0_i32, %arg1 : i32, i32, i32
  }
  func.func @transform_1(%arg0: i32, %arg1: i32) -> (i32, i32) {
    %c0_i32 = arith.constant 0 : i32
    %c0_i32_0 = arith.constant 0 : i32
    %c0_i32_1 = arith.constant 0 : i32
    return %c0_i32, %c0_i32_0 : i32, i32
  }
  func.func @transform_2(%arg0: i32, %arg1: i32) -> (i32, i32) {
    %c0_i32 = arith.constant 0 : i32
    %c0_i32_0 = arith.constant 0 : i32
    %c0_i32_1 = arith.constant 0 : i32
    return %c0_i32, %c0_i32_0 : i32, i32
  }
  func.func @transform_3(%arg0: i32, %arg1: i32) -> (i32, i32, i32) {
    %c0_i32 = arith.constant 0 : i32
    %c0_i32_0 = arith.constant 0 : i32
    return %arg0, %c0_i32, %arg1 : i32, i32, i32
  }
}

</mosaic_0001>

<llo_original>
// kernel: conv_bn_relu_forward.3
$region0: #{conv_bn_relu_forward.3}
  #allocation0 [shape = 'u32[]', space=smem, size = 0x4, offset = 0x4, fixed_abs, tag = 'smem constant byte address 0x4 - core index']
  #allocation1 [shape = 'u32[144,128]{1,0:T(1,128)}', space=vmem, size = 0x12000, scoped, tag = 'internal scratch']
  %s0 = inlined_call_operand.vmem [shape: f32[2,8,256], index: 0, kind: input, shape index: {}, may-alias: {0,3}]
  %s1 = inlined_call_operand.vmem [shape: f32[8,1], index: 1, kind: input, shape index: {}]
  %s2 = inlined_call_operand.vmem [shape: f32[8,1], index: 2, kind: input, shape index: {}]
  %s3 = inlined_call_operand.vmem [shape: f32[2,8,256], index: 3, kind: output, shape index: {}, may-alias: {0,3}]
  %s4 = sld [smem:[#allocation0]]
  $region45: #{conv_bn_relu_forward.3} parent=0
    _
  %s6 = ssub.s32 1, %s4
  %s7 = scalar_select 0, %s6, %s4
  loop: start=0, step=1, limit=4
  $region2: #{conv_bn_relu_forward.3} parent=0 // loop_pre_header
    _
  $region3: #{conv_bn_relu_forward.3} parent=0 // loop_header
    %s9 = sphi 0, %s13
    %p10 = scmp.ge.s32.totalorder %s9, 4
    %s16 = sphi 0, %s28
    %s17 = sphi 0, %s24
    %s18 = sphi 0, %s16
    %s19 = sphi 0, %s17
    %s20 = sphi 0, %s18
    %s21 = sphi 0, %s19
    %s33 = sphi 0, %s35
    %s36 = sphi 0, %s33
    %s37 = sphi 0, %s36
    %s53 = sphi 0, %s37
    %s57 = sphi 0, %s57
    %s59 = sphi 0, %s57
    %s60 = sphi 0, %s59
    %s74 = sphi 0, %s60
    %s78 = sphi 0, %s78
    %s80 = sphi 0, %s78
    %s81 = sphi 0, %s80
    %s95 = sphi 0, %s81
    %s103 = sphi 0, %s105
    %s106 = sphi 0, %s103
    %s107 = sphi 0, %s106
    %s123 = sphi 0, %s107
  $region4: #{conv_bn_relu_forward.3} parent=0 // loop_header_branch
    %12 = sbr.rel (%p10) target = $region8
  $region5: #{conv_bn_relu_forward.3} parent=0 // loop_body
    %s14 = ssub.s32 %s9, 1
    %s15 = ssub.s32 %s9, 2
    %s22 = sadd.s32 1, %s17
    %p23 = scmp.ge.s32.totalorder %s22, 1
    %s24 = scalar_select %p23, 0, %s22
    %s25 = sadd.s32 1, %s16
    %s26 = scalar_select %p23, %s25, %s16
    %p27 = scmp.ge.s32.totalorder %s26, 2
    %s28 = scalar_select %p27, 0, %s26
    %s29 = ssub.s32 %s16, %s28
    %s30 = ssub.s32 %s17, %s24
    %s31 = sor.u32 %s29, %s30
    %p32 = scmp.eq.s32.totalorder %s31, 0
    %s34 = sadd.s32 %s33, 1
    %s35 = scalar_select %p32, %s33, %s34
    %p38 = pneg %p32
    %p39 = scmp.eq.s32.totalorder %s9, 1
    %p40 = por %p38, %p39
    %p41 = scmp.ne.s32.totalorder %s33, %s36
    %p42 = scmp.eq.s32.totalorder %s9, 0
    %p43 = por %p41, %p42
    %p44 = scmp.ne.s32.totalorder %s33, %s36
    %p45 = scmp.eq.s32.totalorder %s14, 1
    %p46 = por %p44, %p45
    %p47 = scmp.ne.s32.totalorder %s36, %s37
    %p48 = scmp.eq.s32.totalorder %s14, 0
    %p49 = por %p47, %p48
    %p50 = scmp.ne.s32.totalorder %s36, %s37
    %p51 = scmp.eq.s32.totalorder %s15, 1
    %p52 = por %p50, %p51
    %p54 = scmp.ne.s32.totalorder %s37, %s53
    %p55 = scmp.eq.s32.totalorder %s15, 0
    %p56 = por %p54, %p55
    %s58 = sadd.s32 %s57, 1
    %p61 = scmp.eq.s32.totalorder %s9, 1
    %p62 = scmp.ne.s32.totalorder %s57, %s59
    %p63 = scmp.eq.s32.totalorder %s9, 0
    %p64 = por %p62, %p63
    %p65 = scmp.ne.s32.totalorder %s57, %s59
    %p66 = scmp.eq.s32.totalorder %s14, 1
    %p67 = por %p65, %p66
    %p68 = scmp.ne.s32.totalorder %s59, %s60
    %p69 = scmp.eq.s32.totalorder %s14, 0
    %p70 = por %p68, %p69
    %p71 = scmp.ne.s32.totalorder %s59, %s60
    %p72 = scmp.eq.s32.totalorder %s15, 1
    %p73 = por %p71, %p72
    %p75 = scmp.ne.s32.totalorder %s60, %s74
    %p76 = scmp.eq.s32.totalorder %s15, 0
    %p77 = por %p75, %p76
    %s79 = sadd.s32 %s78, 1
    %p82 = scmp.eq.s32.totalorder %s9, 1
    %p83 = scmp.ne.s32.totalorder %s78, %s80
    %p84 = scmp.eq.s32.totalorder %s9, 0
    %p85 = por %p83, %p84
    %p86 = scmp.ne.s32.totalorder %s78, %s80
    %p87 = scmp.eq.s32.totalorder %s14, 1
    %p88 = por %p86, %p87
    %p89 = scmp.ne.s32.totalorder %s80, %s81
    %p90 = scmp.eq.s32.totalorder %s14, 0
    %p91 = por %p89, %p90
    %p92 = scmp.ne.s32.totalorder %s80, %s81
    %p93 = scmp.eq.s32.totalorder %s15, 1
    %p94 = por %p92, %p93
    %p96 = scmp.ne.s32.totalorder %s81, %s95
    %p97 = scmp.eq.s32.totalorder %s15, 0
    %p98 = por %p96, %p97
    %s99 = ssub.s32 %s16, %s28
    %s100 = ssub.s32 %s17, %s24
    %s101 = sor.u32 %s99, %s100
    %p102 = scmp.eq.s32.totalorder %s101, 0
    %s104 = sadd.s32 %s103, 1
    %s105 = scalar_select %p102, %s103, %s104
    %p108 = pneg %p102
    %p109 = scmp.eq.s32.totalorder %s9, 1
    %p110 = por %p108, %p109
    %p111 = scmp.ne.s32.totalorder %s103, %s106
    %p112 = scmp.eq.s32.totalorder %s9, 0
    %p113 = por %p111, %p112
    %p114 = scmp.ne.s32.totalorder %s103, %s106
    %p115 = scmp.eq.s32.totalorder %s14, 1
    %p116 = por %p114, %p115
    %p117 = scmp.ne.s32.totalorder %s106, %s107
    %p118 = scmp.eq.s32.totalorder %s14, 0
    %p119 = por %p117, %p118
    %p120 = scmp.ne.s32.totalorder %s106, %s107
    %p121 = scmp.eq.s32.totalorder %s15, 1
    %p122 = por %p120, %p121
    %p124 = scmp.ne.s32.totalorder %s107, %s123
    %p125 = scmp.eq.s32.totalorder %s15, 0
    %p126 = por %p124, %p125
    %p127 = scmp.le.s32.totalorder 1, %s9
    %p128 = scmp.lt.s32.totalorder %s9, 3
    %p129 = pnand %p127, %p128
    %p130 = pneg %p129
    // Predicated region
    $region9: #{conv_bn_relu_forward.3} parent=5 // pred_check
      _
    $region10: #{conv_bn_relu_forward.3} parent=5 // pred_check_branch
      %132 = sbr.rel (%p129) target = $region12
    $region11: #{conv_bn_relu_forward.3} parent=5 // pred_region
      %s133 = ssub.s32 %s9, 1
      // Predicated region
      $region13: #{conv_bn_relu_forward.3} parent=11 // pred_check
        %p134 = pneg %p70
      $region14: #{conv_bn_relu_forward.3} parent=11 // pred_check_branch
        %136 = sbr.rel (%p134) target = $region16
      $region15: #{conv_bn_relu_forward.3} parent=11 // pred_region
        _
      $region16: #{conv_bn_relu_forward.3} parent=11 // pred_fallthru
        _
      // Predicated region
      $region17: #{conv_bn_relu_forward.3} parent=11 // pred_check
        %p137 = pneg %p91
      $region18: #{conv_bn_relu_forward.3} parent=11 // pred_check_branch
        %139 = sbr.rel (%p137) target = $region20
      $region19: #{conv_bn_relu_forward.3} parent=11 // pred_region
        _
      $region20: #{conv_bn_relu_forward.3} parent=11 // pred_fallthru
        _
    $region12: #{conv_bn_relu_forward.3} parent=5 // pred_fallthru
      _
    %p140 = scmp.lt.s32.totalorder %s9, 2
    // Predicated region
    $region21: #{conv_bn_relu_forward.3} parent=5 // pred_check
      %p141 = pneg %p140
    $region22: #{conv_bn_relu_forward.3} parent=5 // pred_check_branch
      %143 = sbr.rel (%p141) target = $region24
    $region23: #{conv_bn_relu_forward.3} parent=5 // pred_region
      // Predicated region
      $region25: #{conv_bn_relu_forward.3} parent=23 // pred_check
        %p144 = pneg %p43
      $region26: #{conv_bn_relu_forward.3} parent=23 // pred_check_branch
        %146 = sbr.rel (%p144) target = $region28
      $region27: #{conv_bn_relu_forward.3} parent=23 // pred_region
        %s147 = smul.u32 2, %s17
        %p148 = scmp.lt.s32.totalorder %s16, 1
        %s149 = scalar_select %p148, %s16, 1
        %p150 = scmp.lt.s32.totalorder %s147, 1
        %s151 = scalar_select %p150, %s147, 1
        %s152 = smul.addr %s149, 2
        %s153 = sadd.s32 %s151, %s152
        %s154 = smul.addr %s153, 8
        %s155 = scalar_lea.vmem %s0, %s154
        %s156 = smul.u32 2, %s17
      $region28: #{conv_bn_relu_forward.3} parent=23 // pred_fallthru
        _
    $region24: #{conv_bn_relu_forward.3} parent=5 // pred_fallthru
      _
    %p157 = scmp.le.s32.totalorder 1, %s9
    %p158 = scmp.lt.s32.totalorder %s9, 3
    %p159 = pnand %p157, %p158
    %p160 = pneg %p159
    // Predicated region
    $region29: #{conv_bn_relu_forward.3} parent=5 // pred_check
      _
    $region30: #{conv_bn_relu_forward.3} parent=5 // pred_check_branch
      %162 = sbr.rel (%p159) target = $region32
    $region31: #{conv_bn_relu_forward.3} parent=5 // pred_region
      %s163 = ssub.s32 %s9, 1
      %s164 = smul.u32 2, %s19
      %p165 = scmp.lt.s32.totalorder %s18, 1
      %s166 = scalar_select %p165, %s18, 1
      %p167 = scmp.lt.s32.totalorder %s164, 1
      %s168 = scalar_select %p167, %s164, 1
      %s169 = smul.addr %s166, 2
      %s170 = sadd.s32 %s168, %s169
      %s171 = smul.addr %s170, 8
      %s172 = scalar_lea.vmem %s0, %s171
      %p173 = pneg %p49
      %p174 = pneg %p46
      %p175 = pneg %p70
      %p176 = pneg %p67
      %p177 = pneg %p91
      %p178 = pneg %p88
      %p179 = pneg %p119
      %p180 = pneg %p116
      %s181 = smul.u32 2, %s19
      %p182 = scmp.lt.s32.totalorder %s18, 1
      %s183 = scalar_select %p182, %s18, 1
      %p184 = scmp.lt.s32.totalorder %s181, 1
      %s185 = scalar_select %p184, %s181, 1
      %s186 = smul.addr %s183, 2
      %s187 = sadd.s32 %s185, %s186
      %s188 = smul.addr %s187, 8
      %s189 = scalar_lea.vmem %s3, %s188
      %s190 = smul.u32 2, %s19
      %p191 = scmp.lt.s32.totalorder %s18, 1
      %s192 = scalar_select %p191, %s18, 1
      %p193 = scmp.lt.s32.totalorder %s190, 1
      %s194 = scalar_select %p193, %s190, 1
      %s195 = smul.addr %s192, 2
      %s196 = sadd.s32 %s194, %s195
      %s197 = smul.addr %s196, 8
      %s198 = scalar_lea.vmem %s0, %s197
      %s199 = smul.u32 2, %s19
      %s200 = smul.u32 2, %s19
      %p201 = scmp.lt.s32.totalorder %s18, 1
      %s202 = scalar_select %p201, %s18, 1
      %p203 = scmp.lt.s32.totalorder %s200, 1
      %s204 = scalar_select %p203, %s200, 1
      %s205 = smul.addr %s202, 2
      %s206 = sadd.s32 %s204, %s205
      %s207 = smul.addr %s206, 8
      %s208 = scalar_lea.vmem %s3, %s207
      %s209 = smul.u32 2, %s19
      %v210 = vld [vmem:[%s198] sm:$0xff]
      %v211 = vld [vmem:[%s198 + $0x8] sm:$0xff]
      %v212 = vld [vmem:[%s1] sm:$0xff]
      %214 = vset.pattern.permute.xlu0 0
      %215 = vperm.xlu0 %214, %v212
      %v216 = vpop.permute.xlu0 %215
      %v218 = vmul.f32 %v210, %v216
      %v219 = vmul.f32 %v211, %v216
      %v220 = vld [vmem:[%s2] sm:$0xff]
      %222 = vset.pattern.permute.xlu0 0
      %223 = vperm.xlu0 %222, %v220
      %v224 = vpop.permute.xlu0 %223
      %v226 = vadd.f32 %v218, %v224
      %v227 = vadd.f32 %v219, %v224
      %v228 = vmin.f32 %v226, 0.0
      %v229 = vmin.f32 %v227, 0.0
      %v230 = vmul.f32 %v228, 1.442695
      %v231 = vpow.pop %v230
      %v232 = vmul.f32 %v229, 1.442695
      %v233 = vpow.pop %v232
      %v234 = vsub.f32 %v231, 1.0
      %v235 = vsub.f32 %v233, 1.0
      %v236 = vmul.f32 %v234, 1.6732632
      %v237 = vmul.f32 %v235, 1.6732632
      %vm238 = vcmp.gt.f32.partialorder %v226, 0.0
      %vm239 = vcmp.gt.f32.partialorder %v227, 0.0
      %v240 = vsel %vm238, %v226, %v236
      %v241 = vsel %vm239, %v227, %v237
      %v242 = vmul.f32 %v240, 1.050701
      %v243 = vmul.f32 %v241, 1.050701
      %244 = vst [vmem:[%s208] sm:$0xff] %v242
      %245 = vst [vmem:[%s208 + $0x8] sm:$0xff] %v243
      %s246 = smul.u32 2, %s19
      %p247 = scmp.lt.s32.totalorder %s18, 1
      %s248 = scalar_select %p247, %s18, 1
      %p249 = scmp.lt.s32.totalorder %s246, 1
      %s250 = scalar_select %p249, %s246, 1
      %s251 = smul.addr %s248, 2
      %s252 = sadd.s32 %s250, %s251
      %s253 = smul.addr %s252, 8
      %s254 = scalar_lea.vmem %s3, %s253
      // Predicated region
      $region33: #{conv_bn_relu_forward.3} parent=31 // pred_check
        %p255 = pneg %p116
      $region34: #{conv_bn_relu_forward.3} parent=31 // pred_check_branch
        %257 = sbr.rel (%p255) target = $region36
      $region35: #{conv_bn_relu_forward.3} parent=31 // pred_region
        %s258 = smul.u32 2, %s19
      $region36: #{conv_bn_relu_forward.3} parent=31 // pred_fallthru
        _
    $region32: #{conv_bn_relu_forward.3} parent=5 // pred_fallthru
      _
    %p259 = scmp.le.s32.totalorder 2, %s9
    // Predicated region
    $region37: #{conv_bn_relu_forward.3} parent=5 // pred_check
      %p260 = pneg %p259
    $region38: #{conv_bn_relu_forward.3} parent=5 // pred_check_branch
      %262 = sbr.rel (%p260) target = $region40
    $region39: #{conv_bn_relu_forward.3} parent=5 // pred_region
      %s263 = ssub.s32 %s9, 2
      // Predicated region
      $region41: #{conv_bn_relu_forward.3} parent=39 // pred_check
        %p264 = pneg %p122
      $region42: #{conv_bn_relu_forward.3} parent=39 // pred_check_branch
        %266 = sbr.rel (%p264) target = $region44
      $region43: #{conv_bn_relu_forward.3} parent=39 // pred_region
        %s267 = smul.u32 2, %s21
        %p268 = scmp.lt.s32.totalorder %s20, 1
        %s269 = scalar_select %p268, %s20, 1
        %p270 = scmp.lt.s32.totalorder %s267, 1
        %s271 = scalar_select %p270, %s267, 1
        %s272 = smul.addr %s269, 2
        %s273 = sadd.s32 %s271, %s272
        %s274 = smul.addr %s273, 8
        %s275 = scalar_lea.vmem %s3, %s274
      $region44: #{conv_bn_relu_forward.3} parent=39 // pred_fallthru
        _
    $region40: #{conv_bn_relu_forward.3} parent=5 // pred_fallthru
      _
  $region6: #{conv_bn_relu_forward.3} parent=0 // loop_footer
    %s13 = sadd.s32 1, %s9
  $region7: #{conv_bn_relu_forward.3} parent=0 // loop_footer_branch
    %8 = sbr.rel target = $region3
  $region8: #{conv_bn_relu_forward.3} parent=0 // loop_exit
    _

// kernel: conv_bn_relu_forward.2
$region0: #{conv_bn_relu_forward.2}
  #allocation0 [shape = 'u32[]', space=smem, size = 0x4, offset = 0x4, fixed_abs, tag = 'smem constant byte address 0x4 - core index']
  #allocation1 [shape = 'u32[144,128]{1,0:T(1,128)}', space=vmem, size = 0x12000, scoped, tag = 'internal scratch']
  #allocation2 [shape = 'f32[4,18,18]{2,1,0:T(8,128)}', space=vmem, size = 0xc000, scoped, tag = 'scratch operand']
  %s0 = inlined_call_operand.hbm [shape: f32[2,4,16,16], index: 0, kind: input, shape index: {}]
  %s1 = inlined_call_operand.vmem [shape: f32[8,36], index: 1, kind: input, shape index: {}]
  %s2 = inlined_call_operand.vmem [shape: f32[2,8,256], index: 2, kind: output, shape index: {0}]
  %s3 = inlined_call_operand.vmem [shape: f32[2,8,1], index: 3, kind: output, shape index: {1}]
  %s4 = inlined_call_operand.vmem [shape: f32[2,8,1], index: 4, kind: output, shape index: {2}]
  %5 = xla_tuple %s2, %s3, %s4
  %s6 = sld [smem:[#allocation0]]
  $region61: #{conv_bn_relu_forward.2} parent=0
    _
  %s8 = ssub.s32 1, %s6
  %s9 = scalar_select 0, %s8, %s6
  $region1: #{conv_bn_relu_forward.2} parent=0
    #allocation3 [shape = 'u8[65536]{0}', space=vmem, size = 0x10000, scoped, tag = 'input window, operand 0']
    #allocation4 [shape = 's32[2]{0}', space=sflag, size = 0x8, scoped, tag = 'scoped memory for conv_bn_relu_forward.2']
    %10 = vsyncpa [#allocation4], 0
    %s11 = scalar_lea.sflag [#allocation4], 1
    %12 = vsyncpa %s11, 0
    loop: start=0, step=1, limit=4
    $region2: #{conv_bn_relu_forward.2} parent=1 // loop_pre_header
      _
    $region3: #{conv_bn_relu_forward.2} parent=1 // loop_header
      %s14 = sphi 0, %s18
      %p15 = scmp.ge.s32.totalorder %s14, 4
      %s24 = sphi 0, %s26
      %s27 = sphi 0, %s24
      %s28 = sphi 0, %s27
      %s44 = sphi 0, %s28
      %s48 = sphi 0, %s48
      %s50 = sphi 0, %s48
      %s51 = sphi 0, %s50
      %s65 = sphi 0, %s51
      %s71 = sphi 0, %s73
      %s74 = sphi 0, %s71
      %s75 = sphi 0, %s74
      %s91 = sphi 0, %s75
      %s97 = sphi 0, %s99
      %s100 = sphi 0, %s97
      %s101 = sphi 0, %s100
      %s117 = sphi 0, %s101
      %s123 = sphi 0, %s125
      %s126 = sphi 0, %s123
      %s127 = sphi 0, %s126
      %s143 = sphi 0, %s127
    $region4: #{conv_bn_relu_forward.2} parent=1 // loop_header_branch
      %17 = sbr.rel (%p15) target = $region8
    $region5: #{conv_bn_relu_forward.2} parent=1 // loop_body
      %s19 = ssub.s32 %s14, 1
      %s20 = ssub.s32 %s14, 2
      %s21 = sadd.s32 %s14, 1
      %s22 = ssub.s32 %s14, %s21
      %p23 = scmp.eq.s32.totalorder %s22, 0
      %s25 = sadd.s32 %s24, 1
      %s26 = scalar_select %p23, %s24, %s25
      %p29 = pneg %p23
      %p30 = scmp.eq.s32.totalorder %s14, 1
      %p31 = por %p29, %p30
      %p32 = scmp.ne.s32.totalorder %s24, %s27
      %p33 = scmp.eq.s32.totalorder %s14, 0
      %p34 = por %p32, %p33
      %p35 = scmp.ne.s32.totalorder %s24, %s27
      %p36 = scmp.eq.s32.totalorder %s19, 1
      %p37 = por %p35, %p36
      %p38 = scmp.ne.s32.totalorder %s27, %s28
      %p39 = scmp.eq.s32.totalorder %s19, 0
      %p40 = por %p38, %p39
      %p41 = scmp.ne.s32.totalorder %s27, %s28
      %p42 = scmp.eq.s32.totalorder %s20, 1
      %p43 = por %p41, %p42
      %p45 = scmp.ne.s32.totalorder %s28, %s44
      %p46 = scmp.eq.s32.totalorder %s20, 0
      %p47 = por %p45, %p46
      %s49 = sadd.s32 %s48, 1
      %p52 = scmp.eq.s32.totalorder %s14, 1
      %p53 = scmp.ne.s32.totalorder %s48, %s50
      %p54 = scmp.eq.s32.totalorder %s14, 0
      %p55 = por %p53, %p54
      %p56 = scmp.ne.s32.totalorder %s48, %s50
      %p57 = scmp.eq.s32.totalorder %s19, 1
      %p58 = por %p56, %p57
      %p59 = scmp.ne.s32.totalorder %s50, %s51
      %p60 = scmp.eq.s32.totalorder %s19, 0
      %p61 = por %p59, %p60
      %p62 = scmp.ne.s32.totalorder %s50, %s51
      %p63 = scmp.eq.s32.totalorder %s20, 1
      %p64 = por %p62, %p63
      %p66 = scmp.ne.s32.totalorder %s51, %s65
      %p67 = scmp.eq.s32.totalorder %s20, 0
      %p68 = por %p66, %p67
      %s69 = ssub.s32 %s14, %s21
      %p70 = scmp.eq.s32.totalorder %s69, 0
      %s72 = sadd.s32 %s71, 1
      %s73 = scalar_select %p70, %s71, %s72
      %p76 = pneg %p70
      %p77 = scmp.eq.s32.totalorder %s14, 1
      %p78 = por %p76, %p77
      %p79 = scmp.ne.s32.totalorder %s71, %s74
      %p80 = scmp.eq.s32.totalorder %s14, 0
      %p81 = por %p79, %p80
      %p82 = scmp.ne.s32.totalorder %s71, %s74
      %p83 = scmp.eq.s32.totalorder %s19, 1
      %p84 = por %p82, %p83
      %p85 = scmp.ne.s32.totalorder %s74, %s75
      %p86 = scmp.eq.s32.totalorder %s19, 0
      %p87 = por %p85, %p86
      %p88 = scmp.ne.s32.totalorder %s74, %s75
      %p89 = scmp.eq.s32.totalorder %s20, 1
      %p90 = por %p88, %p89
      %p92 = scmp.ne.s32.totalorder %s75, %s91
      %p93 = scmp.eq.s32.totalorder %s20, 0
      %p94 = por %p92, %p93
      %s95 = ssub.s32 %s14, %s21
      %p96 = scmp.eq.s32.totalorder %s95, 0
      %s98 = sadd.s32 %s97, 1
      %s99 = scalar_select %p96, %s97, %s98
      %p102 = pneg %p96
      %p103 = scmp.eq.s32.totalorder %s14, 1
      %p104 = por %p102, %p103
      %p105 = scmp.ne.s32.totalorder %s97, %s100
      %p106 = scmp.eq.s32.totalorder %s14, 0
      %p107 = por %p105, %p106
      %p108 = scmp.ne.s32.totalorder %s97, %s100
      %p109 = scmp.eq.s32.totalorder %s19, 1
      %p110 = por %p108, %p109
      %p111 = scmp.ne.s32.totalorder %s100, %s101
      %p112 = scmp.eq.s32.totalorder %s19, 0
      %p113 = por %p111, %p112
      %p114 = scmp.ne.s32.totalorder %s100, %s101
      %p115 = scmp.eq.s32.totalorder %s20, 1
      %p116 = por %p114, %p115
      %p118 = scmp.ne.s32.totalorder %s101, %s117
      %p119 = scmp.eq.s32.totalorder %s20, 0
      %p120 = por %p118, %p119
      %s121 = ssub.s32 %s14, %s21
      %p122 = scmp.eq.s32.totalorder %s121, 0
      %s124 = sadd.s32 %s123, 1
      %s125 = scalar_select %p122, %s123, %s124
      %p128 = pneg %p122
      %p129 = scmp.eq.s32.totalorder %s14, 1
      %p130 = por %p128, %p129
      %p131 = scmp.ne.s32.totalorder %s123, %s126
      %p132 = scmp.eq.s32.totalorder %s14, 0
      %p133 = por %p131, %p132
      %p134 = scmp.ne.s32.totalorder %s123, %s126
      %p135 = scmp.eq.s32.totalorder %s19, 1
      %p136 = por %p134, %p135
      %p137 = scmp.ne.s32.totalorder %s126, %s127
      %p138 = scmp.eq.s32.totalorder %s19, 0
      %p139 = por %p137, %p138
      %p140 = scmp.ne.s32.totalorder %s126, %s127
      %p141 = scmp.eq.s32.totalorder %s20, 1
      %p142 = por %p140, %p141
      %p144 = scmp.ne.s32.totalorder %s127, %s143
      %p145 = scmp.eq.s32.totalorder %s20, 0
      %p146 = por %p144, %p145
      %p147 = scmp.le.s32.totalorder 1, %s14
      %p148 = scmp.lt.s32.totalorder %s14, 3
      %p149 = pnand %p147, %p148
      %p150 = pneg %p149
      // Predicated region
      $region9: #{conv_bn_relu_forward.2} parent=5 // pred_check
        _
      $region10: #{conv_bn_relu_forward.2} parent=5 // pred_check_branch
        %152 = sbr.rel (%p149) target = $region12
      $region11: #{conv_bn_relu_forward.2} parent=5 // pred_region
        %s153 = ssub.s32 %s14, 1
        // Predicated region
        $region13: #{conv_bn_relu_forward.2} parent=11 // pred_check
          %p154 = pneg %p61
        $region14: #{conv_bn_relu_forward.2} parent=11 // pred_check_branch
          %156 = sbr.rel (%p154) target = $region16
        $region15: #{conv_bn_relu_forward.2} parent=11 // pred_region
          _
        $region16: #{conv_bn_relu_forward.2} parent=11 // pred_fallthru
          _
      $region12: #{conv_bn_relu_forward.2} parent=5 // pred_fallthru
        _
      %p157 = scmp.lt.s32.totalorder %s14, 2
      // Predicated region
      $region17: #{conv_bn_relu_forward.2} parent=5 // pred_check
        %p158 = pneg %p157
      $region18: #{conv_bn_relu_forward.2} parent=5 // pred_check_branch
        %160 = sbr.rel (%p158) target = $region20
      $region19: #{conv_bn_relu_forward.2} parent=5 // pred_region
        // Predicated region
        $region21: #{conv_bn_relu_forward.2} parent=19 // pred_check
          %p161 = pneg %p34
        $region22: #{conv_bn_relu_forward.2} parent=19 // pred_check_branch
          %163 = sbr.rel (%p161) target = $region24
        $region23: #{conv_bn_relu_forward.2} parent=19 // pred_region
          %s164 = sand.u32 %s24, 1
          %s165 = scalar_lea.sflag [#allocation4], %s164
          %s166 = sand.u32 %s24, 1
          %s167 = smul.addr %s166, 64
          %s168 = scalar_lea.vmem [#allocation3], %s167
          %s170 = ssub.s32 1024, 1024
          %171 = vsyncadd %s165, %s170
          %s172 = smul.addr %s14, 8
          %s173 = smul.addr %s172, 128
          %s174 = scalar_lea.hbm %s0, %s173
          %s175 = sshll.u32 %s168, 4
          %s176 = int_to_ptr.vmem [resolvable:$true] %s175
          %181 = dma.hbm_to_vmem [thread:$0]  %s174, 1024, %s176, %s165, 128, 128, 8
        $region24: #{conv_bn_relu_forward.2} parent=19 // pred_fallthru
          _
      $region20: #{conv_bn_relu_forward.2} parent=5 // pred_fallthru
        _
      %p182 = scmp.le.s32.totalorder 1, %s14
      %p183 = scmp.lt.s32.totalorder %s14, 3
      %p184 = pnand %p182, %p183
      %p185 = pneg %p184
      // Predicated region
      $region25: #{conv_bn_relu_forward.2} parent=5 // pred_check
        _
      $region26: #{conv_bn_relu_forward.2} parent=5 // pred_check_branch
        %187 = sbr.rel (%p184) target = $region28
      $region27: #{conv_bn_relu_forward.2} parent=5 // pred_region
        %s188 = ssub.s32 %s14, 1
        %s189 = sand.u32 %s27, 1
        %s190 = scalar_lea.sflag [#allocation4], %s189
        %s191 = sand.u32 %s27, 1
        %s192 = smul.addr %s191, 64
        %s193 = scalar_lea.vmem [#allocation3], %s192
        // Predicated region
        $region29: #{conv_bn_relu_forward.2} parent=27 // pred_check
          %p194 = pneg %p40
        $region30: #{conv_bn_relu_forward.2} parent=27 // pred_check_branch
          %196 = sbr.rel (%p194) target = $region32
        $region31: #{conv_bn_relu_forward.2} parent=27 // pred_region
          %197 = dma.done %s190, 1024
        $region32: #{conv_bn_relu_forward.2} parent=27 // pred_fallthru
          _
        %s198 = sand.u32 %s27, 1
        %s199 = scalar_lea.sflag [#allocation4], %s198
        %s200 = sand.u32 %s27, 1
        %s201 = smul.addr %s200, 64
        %s202 = scalar_lea.vmem [#allocation3], %s201
        %p203 = pneg %p40
        %p204 = pneg %p37
        %p205 = pneg %p61
        %p206 = pneg %p58
        %p207 = pneg %p87
        %p208 = pneg %p84
        %p209 = scmp.lt.s32.totalorder %s19, 1
        %s210 = scalar_select %p209, %s19, 1
        %s211 = smul.addr %s210, 2
        %s212 = smul.addr %s211, 8
        %s213 = scalar_lea.vmem %s2, %s212
        %p214 = pneg %p113
        %p215 = pneg %p110
        %p216 = scmp.lt.s32.totalorder %s19, 1
        %s217 = scalar_select %p216, %s19, 1
        %s218 = smul.addr %s217, 8
        %s219 = scalar_lea.vmem %s3, %s218
        %p220 = pneg %p139
        %p221 = pneg %p136
        %p222 = scmp.lt.s32.totalorder %s19, 1
        %s223 = scalar_select %p222, %s19, 1
        %s224 = smul.addr %s223, 8
        %s225 = scalar_lea.vmem %s4, %s224
        %p226 = scmp.lt.s32.totalorder %s19, 1
        %s227 = scalar_select %p226, %s19, 1
        %s228 = smul.addr %s227, 2
        %s229 = smul.addr %s228, 8
        %s230 = scalar_lea.vmem %s2, %s229
        %p231 = scmp.lt.s32.totalorder %s19, 1
        %s232 = scalar_select %p231, %s19, 1
        %s233 = smul.addr %s232, 8
        %s234 = scalar_lea.vmem %s3, %s233
        %p235 = scmp.lt.s32.totalorder %s19, 1
        %s236 = scalar_select %p235, %s19, 1
        %s237 = smul.addr %s236, 8
        %s238 = scalar_lea.vmem %s4, %s237
        %vm239 = vcmask 139264
        %240 = vst.msk [vmem:[#allocation2] sm:$0x1] %vm239, 0.0
        %241 = vst.msk [vmem:[#allocation2 + $0x18] sm:$0x1] %vm239, 0.0
        %242 = vst.msk [vmem:[#allocation2 + $0x30] sm:$0x1] %vm239, 0.0
        %243 = vst.msk [vmem:[#allocation2 + $0x48] sm:$0x1] %vm239, 0.0
        %244 = vst.msk [vmem:[#allocation2 + $0x11] sm:$0x1] %vm239, 0.0
        %245 = vst.msk [vmem:[#allocation2 + $0x29] sm:$0x1] %vm239, 0.0
        %246 = vst.msk [vmem:[#allocation2 + $0x41] sm:$0x1] %vm239, 0.0
        %247 = vst.msk [vmem:[#allocation2 + $0x59] sm:$0x1] %vm239, 0.0
        %vm248 = vcmask 7168
        %249 = vst.msk [vmem:[#allocation2] sm:$0xff] %vm248, 0.0
        %250 = vst.msk [vmem:[#allocation2 + $0x8] sm:$0xff] %vm248, 0.0
        %vm251 = vcmask 1024
        %252 = vst.msk [vmem:[#allocation2 + $0x10] sm:$0x3] %vm251, 0.0
        %253 = vst.msk [vmem:[#allocation2 + $0x18] sm:$0xff] %vm248, 0.0
        %254 = vst.msk [vmem:[#allocation2 + $0x20] sm:$0xff] %vm248, 0.0
        %255 = vst.msk [vmem:[#allocation2 + $0x28] sm:$0x3] %vm251, 0.0
        %256 = vst.msk [vmem:[#allocation2 + $0x30] sm:$0xff] %vm248, 0.0
        %257 = vst.msk [vmem:[#allocation2 + $0x38] sm:$0xff] %vm248, 0.0
        %258 = vst.msk [vmem:[#allocation2 + $0x40] sm:$0x3] %vm251, 0.0
        %259 = vst.msk [vmem:[#allocation2 + $0x48] sm:$0xff] %vm248, 0.0
        %260 = vst.msk [vmem:[#allocation2 + $0x50] sm:$0xff] %vm248, 0.0
        %261 = vst.msk [vmem:[#allocation2 + $0x58] sm:$0x3] %vm251, 0.0
        %vm262 = vcmask 146568
        %263 = vst.msk [vmem:[#allocation2] sm:$0xff] %vm262, 0.0
        %264 = vst.msk [vmem:[#allocation2 + $0x8] sm:$0xff] %vm262, 0.0
        %vm265 = vcmask 140424
        %266 = vst.msk [vmem:[#allocation2 + $0x10] sm:$0x3] %vm265, 0.0
        %267 = vst.msk [vmem:[#allocation2 + $0x18] sm:$0xff] %vm262, 0.0
        %268 = vst.msk [vmem:[#allocation2 + $0x20] sm:$0xff] %vm262, 0.0
        %269 = vst.msk [vmem:[#allocation2 + $0x28] sm:$0x3] %vm265, 0.0
        %270 = vst.msk [vmem:[#allocation2 + $0x30] sm:$0xff] %vm262, 0.0
        %271 = vst.msk [vmem:[#allocation2 + $0x38] sm:$0xff] %vm262, 0.0
        %272 = vst.msk [vmem:[#allocation2 + $0x40] sm:$0x3] %vm265, 0.0
        %273 = vst.msk [vmem:[#allocation2 + $0x48] sm:$0xff] %vm262, 0.0
        %274 = vst.msk [vmem:[#allocation2 + $0x50] sm:$0xff] %vm262, 0.0
        %275 = vst.msk [vmem:[#allocation2 + $0x58] sm:$0x3] %vm265, 0.0
        %v276 = vld [vmem:[%s193] sm:$0xff]
        %v277 = vld [vmem:[%s193 + $0x8] sm:$0xff]
        %v278 = vld [vmem:[%s193 + $0x10] sm:$0xff]
        %v279 = vld [vmem:[%s193 + $0x18] sm:$0xff]
        %v280 = vld [vmem:[%s193 + $0x20] sm:$0xff]
        %v281 = vld [vmem:[%s193 + $0x28] sm:$0xff]
        %v282 = vld [vmem:[%s193 + $0x30] sm:$0xff]
        %v283 = vld [vmem:[%s193 + $0x38] sm:$0xff]
        %292 = vrot.lane.b32.xlu0 %v276, 1
        %v293 = vpop.permute.xlu0 %292
        %294 = vrot.lane.b32.xlu0 %v277, 1
        %v295 = vpop.permute.xlu0 %294
        %296 = vrot.lane.b32.xlu0 %v278, 1
        %v297 = vpop.permute.xlu0 %296
        %298 = vrot.lane.b32.xlu0 %v279, 1
        %v299 = vpop.permute.xlu0 %298
        %300 = vrot.lane.b32.xlu0 %v280, 1
        %v301 = vpop.permute.xlu0 %300
        %302 = vrot.lane.b32.xlu0 %v281, 1
        %v303 = vpop.permute.xlu0 %302
        %304 = vrot.lane.b32.xlu0 %v282, 1
        %v305 = vpop.permute.xlu0 %304
        %306 = vrot.lane.b32.xlu0 %v283, 1
        %v307 = vpop.permute.xlu0 %306
        %vm316 = vcmask 138248
        %317 = vst.msk [vmem:[#allocation2 + $0x1] sm:$0xff] %vm316, %v293
        %318 = vst.msk [vmem:[#allocation2 + $0x9] sm:$0xff] %vm316, %v295
        %319 = vst.msk [vmem:[#allocation2 + $0x19] sm:$0xff] %vm316, %v297
        %320 = vst.msk [vmem:[#allocation2 + $0x21] sm:$0xff] %vm316, %v299
        %321 = vst.msk [vmem:[#allocation2 + $0x31] sm:$0xff] %vm316, %v301
        %322 = vst.msk [vmem:[#allocation2 + $0x39] sm:$0xff] %vm316, %v303
        %323 = vst.msk [vmem:[#allocation2 + $0x49] sm:$0xff] %vm316, %v305
        %324 = vst.msk [vmem:[#allocation2 + $0x51] sm:$0xff] %vm316, %v307
        %v325 = vld [vmem:[#allocation2] sm:$0xff]
        %v326 = vld [vmem:[#allocation2 + $0x8] sm:$0xff]
        %v327 = vld [vmem:[#allocation2 + $0x18] sm:$0xff]
        %v328 = vld [vmem:[#allocation2 + $0x20] sm:$0xff]
        %v329 = vld [vmem:[#allocation2 + $0x30] sm:$0xff]
        %v330 = vld [vmem:[#allocation2 + $0x38] sm:$0xff]
        %v331 = vld [vmem:[#allocation2 + $0x48] sm:$0xff]
        %v332 = vld [vmem:[#allocation2 + $0x50] sm:$0xff]
        %v333 = vcombine.low %v325, %v329
        %v334 = vcombine.high %v325, %v329
        %v336 = vunpack.c.l.s4 1983009808
        %v337 = vunpack.c.0.s8 %v336
        %v338 = vlaneseq
        %v339 = vshrl.u32 %v338, 7
        %v340 = vsub.s32 %v337, %v339
        %v341 = vrot.slane %v333, %v340
        %v343 = vunpack.c.l.s4 1983009808
        %v344 = vunpack.c.0.s8 %v343
        %v345 = vlaneseq
        %v346 = vshrl.u32 %v345, 7
        %v347 = vsub.s32 %v344, %v346
        %v348 = vrot.slane %v334, %v347
        %v349 = vcombine.low %v327, %v331
        %v350 = vcombine.high %v327, %v331
        %v352 = vunpack.c.l.s4 1983009808
        %v353 = vunpack.c.0.s8 %v352
        %v354 = vlaneseq
        %v355 = vshrl.u32 %v354, 7
        %v356 = vsub.s32 %v353, %v355
        %v357 = vrot.slane %v349, %v356
        %v359 = vunpack.c.l.s4 1983009808
        %v360 = vunpack.c.0.s8 %v359
        %v361 = vlaneseq
        %v362 = vshrl.u32 %v361, 7
        %v363 = vsub.s32 %v360, %v362
        %v364 = vrot.slane %v350, %v363
        %v365 = vcombine.low %v341, %v357
        %v366 = vcombine.high %v341, %v357
        %v368 = vunpack.c.l.s4 1934713408
        %v369 = vunpack.c.0.s8 %v368
        %v370 = vlaneseq
        %v371 = vshrl.u32 %v370, 7
        %v372 = vsub.s32 %v369, %v371
        %v373 = vrot.slane %v365, %v372
        %v375 = vunpack.c.l.s4 1934713408
        %v376 = vunpack.c.0.s8 %v375
        %v377 = vlaneseq
        %v378 = vshrl.u32 %v377, 7
        %v379 = vsub.s32 %v376, %v378
        %v380 = vrot.slane %v366, %v379
        %v381 = vcombine.low %v348, %v364
        %v382 = vcombine.high %v348, %v364
        %v384 = vunpack.c.l.s4 1934713408
        %v385 = vunpack.c.0.s8 %v384
        %v386 = vlaneseq
        %v387 = vshrl.u32 %v386, 7
        %v388 = vsub.s32 %v385, %v387
        %v389 = vrot.slane %v381, %v388
        %v391 = vunpack.c.l.s4 1934713408
        %v392 = vunpack.c.0.s8 %v391
        %v393 = vlaneseq
        %v394 = vshrl.u32 %v393, 7
        %v395 = vsub.s32 %v392, %v394
        %v396 = vrot.slane %v382, %v395
        %v397 = vcombine.high %v373, 0.0
        %v398 = vcombine.high %v380, 0.0
        %v399 = vcombine.high %v389, 0.0
        %v400 = vcombine.high %v396, 0.0
        %v401 = vcombine.low %v326, %v330
        %v402 = vcombine.high %v326, %v330
        %v404 = vunpack.c.l.s4 1983009808
        %v405 = vunpack.c.0.s8 %v404
        %v406 = vlaneseq
        %v407 = vshrl.u32 %v406, 7
        %v408 = vsub.s32 %v405, %v407
        %v409 = vrot.slane %v401, %v408
        %v411 = vunpack.c.l.s4 1983009808
        %v412 = vunpack.c.0.s8 %v411
        %v413 = vlaneseq
        %v414 = vshrl.u32 %v413, 7
        %v415 = vsub.s32 %v412, %v414
        %v416 = vrot.slane %v402, %v415
        %v417 = vcombine.low %v328, %v332
        %v418 = vcombine.high %v328, %v332
        %v420 = vunpack.c.l.s4 1983009808
        %v421 = vunpack.c.0.s8 %v420
        %v422 = vlaneseq
        %v423 = vshrl.u32 %v422, 7
        %v424 = vsub.s32 %v421, %v423
        %v425 = vrot.slane %v417, %v424
        %v427 = vunpack.c.l.s4 1983009808
        %v428 = vunpack.c.0.s8 %v427
        %v429 = vlaneseq
        %v430 = vshrl.u32 %v429, 7
        %v431 = vsub.s32 %v428, %v430
        %v432 = vrot.slane %v418, %v431
        %v433 = vcombine.low %v409, %v425
        %v434 = vcombine.high %v409, %v425
        %v436 = vunpack.c.l.s4 1934713408
        %v437 = vunpack.c.0.s8 %v436
        %v438 = vlaneseq
        %v439 = vshrl.u32 %v438, 7
        %v440 = vsub.s32 %v437, %v439
        %v441 = vrot.slane %v433, %v440
        %v443 = vunpack.c.l.s4 1934713408
        %v444 = vunpack.c.0.s8 %v443
        %v445 = vlaneseq
        %v446 = vshrl.u32 %v445, 7
        %v447 = vsub.s32 %v444, %v446
        %v448 = vrot.slane %v434, %v447
        %v449 = vcombine.low %v416, %v432
        %v450 = vcombine.high %v416, %v432
        %v452 = vunpack.c.l.s4 1934713408
        %v453 = vunpack.c.0.s8 %v452
        %v454 = vlaneseq
        %v455 = vshrl.u32 %v454, 7
        %v456 = vsub.s32 %v453, %v455
        %v457 = vrot.slane %v449, %v456
        %v459 = vunpack.c.l.s4 1934713408
        %v460 = vunpack.c.0.s8 %v459
        %v461 = vlaneseq
        %v462 = vshrl.u32 %v461, 7
        %v463 = vsub.s32 %v460, %v462
        %v464 = vrot.slane %v450, %v463
        %v465 = vcombine.high %v441, 0.0
        %v466 = vcombine.high %v448, 0.0
        %v467 = vcombine.high %v457, 0.0
        %v468 = vcombine.high %v464, 0.0
        %470 = vrot.lane.b32.xlu0 %v397, 16
        %v471 = vpop.permute.xlu0 %470
        %474 = vrot.lane.b32.xlu0 %v380, 32
        %v475 = vpop.permute.xlu0 %474
        %478 = vrot.lane.b32.xlu0 %v398, 48
        %v479 = vpop.permute.xlu0 %478
        %482 = vrot.lane.b32.xlu0 %v389, 64
        %v483 = vpop.permute.xlu0 %482
        %486 = vrot.lane.b32.xlu0 %v399, 80
        %v487 = vpop.permute.xlu0 %486
        %490 = vrot.lane.b32.xlu0 %v396, 96
        %v491 = vpop.permute.xlu0 %490
        %494 = vrot.lane.b32.xlu0 %v400, 112
        %v495 = vpop.permute.xlu0 %494
        %498 = vrot.lane.b32.xlu0 %v465, 16
        %v499 = vpop.permute.xlu0 %498
        %502 = vrot.lane.b32.xlu0 %v448, 32
        %v503 = vpop.permute.xlu0 %502
        %506 = vrot.lane.b32.xlu0 %v466, 48
        %v507 = vpop.permute.xlu0 %506
        %510 = vrot.lane.b32.xlu0 %v457, 64
        %v511 = vpop.permute.xlu0 %510
        %514 = vrot.lane.b32.xlu0 %v467, 80
        %v515 = vpop.permute.xlu0 %514
        %518 = vrot.lane.b32.xlu0 %v464, 96
        %v519 = vpop.permute.xlu0 %518
        %522 = vrot.lane.b32.xlu0 %v468, 112
        %v523 = vpop.permute.xlu0 %522
        %vm525 = vcmask 130048
        %v526 = vsel %vm525, %v373, %v471
        %vm527 = vcmask 261120
        %v528 = vsel %vm527, %v526, %v475
        %vm529 = vcmask 392192
        %v530 = vsel %vm529, %v528, %v479
        %vm531 = vcmask 523264
        %v532 = vsel %vm531, %v530, %v483
        %vm533 = vcmask 654336
        %v534 = vsel %vm533, %v532, %v487
        %vm535 = vcmask 785408
        %v536 = vsel %vm535, %v534, %v491
        %vm537 = vcmask 916480
        %v538 = vsel %vm537, %v536, %v495
        %v539 = vsel %vm525, %v441, %v499
        %v540 = vsel %vm527, %v539, %v503
        %v541 = vsel %vm529, %v540, %v507
        %v542 = vsel %vm531, %v541, %v511
        %v543 = vsel %vm533, %v542, %v515
        %v544 = vsel %vm535, %v543, %v519
        %v545 = vsel %vm537, %v544, %v523
        %554 = vrot.lane.b32.xlu0 %v325, 127
        %v555 = vpop.permute.xlu0 %554
        %556 = vrot.lane.b32.xlu0 %v326, 127
        %v557 = vpop.permute.xlu0 %556
        %558 = vrot.lane.b32.xlu0 %v327, 127
        %v559 = vpop.permute.xlu0 %558
        %560 = vrot.lane.b32.xlu0 %v328, 127
        %v561 = vpop.permute.xlu0 %560
        %562 = vrot.lane.b32.xlu0 %v329, 127
        %v563 = vpop.permute.xlu0 %562
        %564 = vrot.lane.b32.xlu0 %v330, 127
        %v565 = vpop.permute.xlu0 %564
        %566 = vrot.lane.b32.xlu0 %v331, 127
        %v567 = vpop.permute.xlu0 %566
        %568 = vrot.lane.b32.xlu0 %v332, 127
        %v569 = vpop.permute.xlu0 %568
        %v578 = vcombine.low %v555, %v563
        %v579 = vcombine.high %v555, %v563
        %v581 = vunpack.c.l.s4 1983009808
        %v582 = vunpack.c.0.s8 %v581
        %v583 = vlaneseq
        %v584 = vshrl.u32 %v583, 7
        %v585 = vsub.s32 %v582, %v584
        %v586 = vrot.slane %v578, %v585
        %v588 = vunpack.c.l.s4 1983009808
        %v589 = vunpack.c.0.s8 %v588
        %v590 = vlaneseq
        %v591 = vshrl.u32 %v590, 7
        %v592 = vsub.s32 %v589, %v591
        %v593 = vrot.slane %v579, %v592
        %v594 = vcombine.low %v559, %v567
        %v595 = vcombine.high %v559, %v567
        %v597 = vunpack.c.l.s4 1983009808
        %v598 = vunpack.c.0.s8 %v597
        %v599 = vlaneseq
        %v600 = vshrl.u32 %v599, 7
        %v601 = vsub.s32 %v598, %v600
        %v602 = vrot.slane %v594, %v601
        %v604 = vunpack.c.l.s4 1983009808
        %v605 = vunpack.c.0.s8 %v604
        %v606 = vlaneseq
        %v607 = vshrl.u32 %v606, 7
        %v608 = vsub.s32 %v605, %v607
        %v609 = vrot.slane %v595, %v608
        %v610 = vcombine.low %v586, %v602
        %v611 = vcombine.high %v586, %v602
        %v613 = vunpack.c.l.s4 1934713408
        %v614 = vunpack.c.0.s8 %v613
        %v615 = vlaneseq
        %v616 = vshrl.u32 %v615, 7
        %v617 = vsub.s32 %v614, %v616
        %v618 = vrot.slane %v610, %v617
        %v620 = vunpack.c.l.s4 1934713408
        %v621 = vunpack.c.0.s8 %v620
        %v622 = vlaneseq
        %v623 = vshrl.u32 %v622, 7
        %v624 = vsub.s32 %v621, %v623
        %v625 = vrot.slane %v611, %v624
        %v626 = vcombine.low %v593, %v609
        %v627 = vcombine.high %v593, %v609
        %v629 = vunpack.c.l.s4 1934713408
        %v630 = vunpack.c.0.s8 %v629
        %v631 = vlaneseq
        %v632 = vshrl.u32 %v631, 7
        %v633 = vsub.s32 %v630, %v632
        %v634 = vrot.slane %v626, %v633
        %v636 = vunpack.c.l.s4 1934713408
        %v637 = vunpack.c.0.s8 %v636
        %v638 = vlaneseq
        %v639 = vshrl.u32 %v638, 7
        %v640 = vsub.s32 %v637, %v639
        %v641 = vrot.slane %v627, %v640
        %v642 = vcombine.high %v618, 0.0
        %v643 = vcombine.high %v625, 0.0
        %v644 = vcombine.high %v634, 0.0
        %v645 = vcombine.high %v641, 0.0
        %v646 = vcombine.low %v557, %v565
        %v647 = vcombine.high %v557, %v565
        %v649 = vunpack.c.l.s4 1983009808
        %v650 = vunpack.c.0.s8 %v649
        %v651 = vlaneseq
        %v652 = vshrl.u32 %v651, 7
        %v653 = vsub.s32 %v650, %v652
        %v654 = vrot.slane %v646, %v653
        %v656 = vunpack.c.l.s4 1983009808
        %v657 = vunpack.c.0.s8 %v656
        %v658 = vlaneseq
        %v659 = vshrl.u32 %v658, 7
        %v660 = vsub.s32 %v657, %v659
        %v661 = vrot.slane %v647, %v660
        %v662 = vcombine.low %v561, %v569
        %v663 = vcombine.high %v561, %v569
        %v665 = vunpack.c.l.s4 1983009808
        %v666 = vunpack.c.0.s8 %v665
        %v667 = vlaneseq
        %v668 = vshrl.u32 %v667, 7
        %v669 = vsub.s32 %v666, %v668
        %v670 = vrot.slane %v662, %v669
        %v672 = vunpack.c.l.s4 1983009808
        %v673 = vunpack.c.0.s8 %v672
        %v674 = vlaneseq
        %v675 = vshrl.u32 %v674, 7
        %v676 = vsub.s32 %v673, %v675
        %v677 = vrot.slane %v663, %v676
        %v678 = vcombine.low %v654, %v670
        %v679 = vcombine.high %v654, %v670
        %v681 = vunpack.c.l.s4 1934713408
        %v682 = vunpack.c.0.s8 %v681
        %v683 = vlaneseq
        %v684 = vshrl.u32 %v683, 7
        %v685 = vsub.s32 %v682, %v684
        %v686 = vrot.slane %v678, %v685
        %v688 = vunpack.c.l.s4 1934713408
        %v689 = vunpack.c.0.s8 %v688
        %v690 = vlaneseq
        %v691 = vshrl.u32 %v690, 7
        %v692 = vsub.s32 %v689, %v691
        %v693 = vrot.slane %v679, %v692
        %v694 = vcombine.low %v661, %v677
        %v695 = vcombine.high %v661, %v677
        %v697 = vunpack.c.l.s4 1934713408
        %v698 = vunpack.c.0.s8 %v697
        %v699 = vlaneseq
        %v700 = vshrl.u32 %v699, 7
        %v701 = vsub.s32 %v698, %v700
        %v702 = vrot.slane %v694, %v701
        %v704 = vunpack.c.l.s4 1934713408
        %v705 = vunpack.c.0.s8 %v704
        %v706 = vlaneseq
        %v707 = vshrl.u32 %v706, 7
        %v708 = vsub.s32 %v705, %v707
        %v709 = vrot.slane %v695, %v708
        %v710 = vcombine.high %v686, 0.0
        %v711 = vcombine.high %v693, 0.0
        %v712 = vcombine.high %v702, 0.0
        %v713 = vcombine.high %v709, 0.0
        %715 = vrot.lane.b32.xlu0 %v642, 16
        %v716 = vpop.permute.xlu0 %715
        %719 = vrot.lane.b32.xlu0 %v625, 32
        %v720 = vpop.permute.xlu0 %719
        %723 = vrot.lane.b32.xlu0 %v643, 48
        %v724 = vpop.permute.xlu0 %723
        %727 = vrot.lane.b32.xlu0 %v634, 64
        %v728 = vpop.permute.xlu0 %727
        %731 = vrot.lane.b32.xlu0 %v644, 80
        %v732 = vpop.permute.xlu0 %731
        %735 = vrot.lane.b32.xlu0 %v641, 96
        %v736 = vpop.permute.xlu0 %735
        %739 = vrot.lane.b32.xlu0 %v645, 112
        %v740 = vpop.permute.xlu0 %739
        %743 = vrot.lane.b32.xlu0 %v710, 16
        %v744 = vpop.permute.xlu0 %743
        %747 = vrot.lane.b32.xlu0 %v693, 32
        %v748 = vpop.permute.xlu0 %747
        %751 = vrot.lane.b32.xlu0 %v711, 48
        %v752 = vpop.permute.xlu0 %751
        %755 = vrot.lane.b32.xlu0 %v702, 64
        %v756 = vpop.permute.xlu0 %755
        %759 = vrot.lane.b32.xlu0 %v712, 80
        %v760 = vpop.permute.xlu0 %759
        %763 = vrot.lane.b32.xlu0 %v709, 96
        %v764 = vpop.permute.xlu0 %763
        %767 = vrot.lane.b32.xlu0 %v713, 112
        %v768 = vpop.permute.xlu0 %767
        %v770 = vsel %vm525, %v618, %v716
        %v771 = vsel %vm527, %v770, %v720
        %v772 = vsel %vm529, %v771, %v724
        %v773 = vsel %vm531, %v772, %v728
        %v774 = vsel %vm533, %v773, %v732
        %v775 = vsel %vm535, %v774, %v736
        %v776 = vsel %vm537, %v775, %v740
        %v777 = vsel %vm525, %v686, %v744
        %v778 = vsel %vm527, %v777, %v748
        %v779 = vsel %vm529, %v778, %v752
        %v780 = vsel %vm531, %v779, %v756
        %v781 = vsel %vm533, %v780, %v760
        %v782 = vsel %vm535, %v781, %v764
        %v783 = vsel %vm537, %v782, %v768
        %784 = vrot.lane.b32.xlu0 %v325, 126
        %v785 = vpop.permute.xlu0 %784
        %786 = vrot.lane.b32.xlu0 %v326, 126
        %v787 = vpop.permute.xlu0 %786
        %788 = vrot.lane.b32.xlu0 %v327, 126
        %v789 = vpop.permute.xlu0 %788
        %790 = vrot.lane.b32.xlu0 %v328, 126
        %v791 = vpop.permute.xlu0 %790
        %792 = vrot.lane.b32.xlu0 %v329, 126
        %v793 = vpop.permute.xlu0 %792
        %794 = vrot.lane.b32.xlu0 %v330, 126
        %v795 = vpop.permute.xlu0 %794
        %796 = vrot.lane.b32.xlu0 %v331, 126
        %v797 = vpop.permute.xlu0 %796
        %798 = vrot.lane.b32.xlu0 %v332, 126
        %v799 = vpop.permute.xlu0 %798
        %v808 = vcombine.low %v785, %v793
        %v809 = vcombine.high %v785, %v793
        %v811 = vunpack.c.l.s4 1983009808
        %v812 = vunpack.c.0.s8 %v811
        %v813 = vlaneseq
        %v814 = vshrl.u32 %v813, 7
        %v815 = vsub.s32 %v812, %v814
        %v816 = vrot.slane %v808, %v815
        %v818 = vunpack.c.l.s4 1983009808
        %v819 = vunpack.c.0.s8 %v818
        %v820 = vlaneseq
        %v821 = vshrl.u32 %v820, 7
        %v822 = vsub.s32 %v819, %v821
        %v823 = vrot.slane %v809, %v822
        %v824 = vcombine.low %v789, %v797
        %v825 = vcombine.high %v789, %v797
        %v827 = vunpack.c.l.s4 1983009808
        %v828 = vunpack.c.0.s8 %v827
        %v829 = vlaneseq
        %v830 = vshrl.u32 %v829, 7
        %v831 = vsub.s32 %v828, %v830
        %v832 = vrot.slane %v824, %v831
        %v834 = vunpack.c.l.s4 1983009808
        %v835 = vunpack.c.0.s8 %v834
        %v836 = vlaneseq
        %v837 = vshrl.u32 %v836, 7
        %v838 = vsub.s32 %v835, %v837
        %v839 = vrot.slane %v825, %v838
        %v840 = vcombine.low %v816, %v832
        %v841 = vcombine.high %v816, %v832
        %v843 = vunpack.c.l.s4 1934713408
        %v844 = vunpack.c.0.s8 %v843
        %v845 = vlaneseq
        %v846 = vshrl.u32 %v845, 7
        %v847 = vsub.s32 %v844, %v846
        %v848 = vrot.slane %v840, %v847
        %v850 = vunpack.c.l.s4 1934713408
        %v851 = vunpack.c.0.s8 %v850
        %v852 = vlaneseq
        %v853 = vshrl.u32 %v852, 7
        %v854 = vsub.s32 %v851, %v853
        %v855 = vrot.slane %v841, %v854
        %v856 = vcombine.low %v823, %v839
        %v857 = vcombine.high %v823, %v839
        %v859 = vunpack.c.l.s4 1934713408
        %v860 = vunpack.c.0.s8 %v859
        %v861 = vlaneseq
        %v862 = vshrl.u32 %v861, 7
        %v863 = vsub.s32 %v860, %v862
        %v864 = vrot.slane %v856, %v863
        %v866 = vunpack.c.l.s4 1934713408
        %v867 = vunpack.c.0.s8 %v866
        %v868 = vlaneseq
        %v869 = vshrl.u32 %v868, 7
        %v870 = vsub.s32 %v867, %v869
        %v871 = vrot.slane %v857, %v870
        %v872 = vcombine.high %v848, 0.0
        %v873 = vcombine.high %v855, 0.0
        %v874 = vcombine.high %v864, 0.0
        %v875 = vcombine.high %v871, 0.0
        %v876 = vcombine.low %v787, %v795
        %v877 = vcombine.high %v787, %v795
        %v879 = vunpack.c.l.s4 1983009808
        %v880 = vunpack.c.0.s8 %v879
        %v881 = vlaneseq
        %v882 = vshrl.u32 %v881, 7
        %v883 = vsub.s32 %v880, %v882
        %v884 = vrot.slane %v876, %v883
        %v886 = vunpack.c.l.s4 1983009808
        %v887 = vunpack.c.0.s8 %v886
        %v888 = vlaneseq
        %v889 = vshrl.u32 %v888, 7
        %v890 = vsub.s32 %v887, %v889
        %v891 = vrot.slane %v877, %v890
        %v892 = vcombine.low %v791, %v799
        %v893 = vcombine.high %v791, %v799
        %v895 = vunpack.c.l.s4 1983009808
        %v896 = vunpack.c.0.s8 %v895
        %v897 = vlaneseq
        %v898 = vshrl.u32 %v897, 7
        %v899 = vsub.s32 %v896, %v898
        %v900 = vrot.slane %v892, %v899
        %v902 = vunpack.c.l.s4 1983009808
        %v903 = vunpack.c.0.s8 %v902
        %v904 = vlaneseq
        %v905 = vshrl.u32 %v904, 7
        %v906 = vsub.s32 %v903, %v905
        %v907 = vrot.slane %v893, %v906
        %v908 = vcombine.low %v884, %v900
        %v909 = vcombine.high %v884, %v900
        %v911 = vunpack.c.l.s4 1934713408
        %v912 = vunpack.c.0.s8 %v911
        %v913 = vlaneseq
        %v914 = vshrl.u32 %v913, 7
        %v915 = vsub.s32 %v912, %v914
        %v916 = vrot.slane %v908, %v915
        %v918 = vunpack.c.l.s4 1934713408
        %v919 = vunpack.c.0.s8 %v918
        %v920 = vlaneseq
        %v921 = vshrl.u32 %v920, 7
        %v922 = vsub.s32 %v919, %v921
        %v923 = vrot.slane %v909, %v922
        %v924 = vcombine.low %v891, %v907
        %v925 = vcombine.high %v891, %v907
        %v927 = vunpack.c.l.s4 1934713408
        %v928 = vunpack.c.0.s8 %v927
        %v929 = vlaneseq
        %v930 = vshrl.u32 %v929, 7
        %v931 = vsub.s32 %v928, %v930
        %v932 = vrot.slane %v924, %v931
        %v934 = vunpack.c.l.s4 1934713408
        %v935 = vunpack.c.0.s8 %v934
        %v936 = vlaneseq
        %v937 = vshrl.u32 %v936, 7
        %v938 = vsub.s32 %v935, %v937
        %v939 = vrot.slane %v925, %v938
        %v940 = vcombine.high %v916, 0.0
        %v941 = vcombine.high %v923, 0.0
        %v942 = vcombine.high %v932, 0.0
        %v943 = vcombine.high %v939, 0.0
        %945 = vrot.lane.b32.xlu0 %v872, 16
        %v946 = vpop.permute.xlu0 %945
        %949 = vrot.lane.b32.xlu0 %v855, 32
        %v950 = vpop.permute.xlu0 %949
        %953 = vrot.lane.b32.xlu0 %v873, 48
        %v954 = vpop.permute.xlu0 %953
        %957 = vrot.lane.b32.xlu0 %v864, 64
        %v958 = vpop.permute.xlu0 %957
        %961 = vrot.lane.b32.xlu0 %v874, 80
        %v962 = vpop.permute.xlu0 %961
        %965 = vrot.lane.b32.xlu0 %v871, 96
        %v966 = vpop.permute.xlu0 %965
        %969 = vrot.lane.b32.xlu0 %v875, 112
        %v970 = vpop.permute.xlu0 %969
        %973 = vrot.lane.b32.xlu0 %v940, 16
        %v974 = vpop.permute.xlu0 %973
        %977 = vrot.lane.b32.xlu0 %v923, 32
        %v978 = vpop.permute.xlu0 %977
        %981 = vrot.lane.b32.xlu0 %v941, 48
        %v982 = vpop.permute.xlu0 %981
        %985 = vrot.lane.b32.xlu0 %v932, 64
        %v986 = vpop.permute.xlu0 %985
        %989 = vrot.lane.b32.xlu0 %v942, 80
        %v990 = vpop.permute.xlu0 %989
        %993 = vrot.lane.b32.xlu0 %v939, 96
        %v994 = vpop.permute.xlu0 %993
        %997 = vrot.lane.b32.xlu0 %v943, 112
        %v998 = vpop.permute.xlu0 %997
        %v1000 = vsel %vm525, %v848, %v946
        %v1001 = vsel %vm527, %v1000, %v950
        %v1002 = vsel %vm529, %v1001, %v954
        %v1003 = vsel %vm531, %v1002, %v958
        %v1004 = vsel %vm533, %v1003, %v962
        %v1005 = vsel %vm535, %v1004, %v966
        %v1006 = vsel %vm537, %v1005, %v970
        %v1007 = vsel %vm525, %v916, %v974
        %v1008 = vsel %vm527, %v1007, %v978
        %v1009 = vsel %vm529, %v1008, %v982
        %v1010 = vsel %vm531, %v1009, %v986
        %v1011 = vsel %vm533, %v1010, %v990
        %v1012 = vsel %vm535, %v1011, %v994
        %v1013 = vsel %vm537, %v1012, %v998
        %v1014 = vld [vmem:[#allocation2 + $0x1] sm:$0xff]
        %v1015 = vld [vmem:[#allocation2 + $0x9] sm:$0xff]
        %v1016 = vld [vmem:[#allocation2 + $0x19] sm:$0xff]
        %v1017 = vld [vmem:[#allocation2 + $0x21] sm:$0xff]
        %v1018 = vld [vmem:[#allocation2 + $0x31] sm:$0xff]
        %v1019 = vld [vmem:[#allocation2 + $0x39] sm:$0xff]
        %v1020 = vld [vmem:[#allocation2 + $0x49] sm:$0xff]
        %v1021 = vld [vmem:[#allocation2 + $0x51] sm:$0xff]
        %v1022 = vcombine.low %v1014, %v1018
        %v1023 = vcombine.high %v1014, %v1018
        %v1025 = vunpack.c.l.s4 1983009808
        %v1026 = vunpack.c.0.s8 %v1025
        %v1027 = vlaneseq
        %v1028 = vshrl.u32 %v1027, 7
        %v1029 = vsub.s32 %v1026, %v1028
        %v1030 = vrot.slane %v1022, %v1029
        %v1032 = vunpack.c.l.s4 1983009808
        %v1033 = vunpack.c.0.s8 %v1032
        %v1034 = vlaneseq
        %v1035 = vshrl.u32 %v1034, 7
        %v1036 = vsub.s32 %v1033, %v1035
        %v1037 = vrot.slane %v1023, %v1036
        %v1038 = vcombine.low %v1016, %v1020
        %v1039 = vcombine.high %v1016, %v1020
        %v1041 = vunpack.c.l.s4 1983009808
        %v1042 = vunpack.c.0.s8 %v1041
        %v1043 = vlaneseq
        %v1044 = vshrl.u32 %v1043, 7
        %v1045 = vsub.s32 %v1042, %v1044
        %v1046 = vrot.slane %v1038, %v1045
        %v1048 = vunpack.c.l.s4 1983009808
        %v1049 = vunpack.c.0.s8 %v1048
        %v1050 = vlaneseq
        %v1051 = vshrl.u32 %v1050, 7
        %v1052 = vsub.s32 %v1049, %v1051
        %v1053 = vrot.slane %v1039, %v1052
        %v1054 = vcombine.low %v1030, %v1046
        %v1055 = vcombine.high %v1030, %v1046
        %v1057 = vunpack.c.l.s4 1934713408
        %v1058 = vunpack.c.0.s8 %v1057
        %v1059 = vlaneseq
        %v1060 = vshrl.u32 %v1059, 7
        %v1061 = vsub.s32 %v1058, %v1060
        %v1062 = vrot.slane %v1054, %v1061
        %v1064 = vunpack.c.l.s4 1934713408
        %v1065 = vunpack.c.0.s8 %v1064
        %v1066 = vlaneseq
        %v1067 = vshrl.u32 %v1066, 7
        %v1068 = vsub.s32 %v1065, %v1067
        %v1069 = vrot.slane %v1055, %v1068
        %v1070 = vcombine.low %v1037, %v1053
        %v1071 = vcombine.high %v1037, %v1053
        %v1073 = vunpack.c.l.s4 1934713408
        %v1074 = vunpack.c.0.s8 %v1073
        %v1075 = vlaneseq
        %v1076 = vshrl.u32 %v1075, 7
        %v1077 = vsub.s32 %v1074, %v1076
        %v1078 = vrot.slane %v1070, %v1077
        %v1080 = vunpack.c.l.s4 1934713408
        %v1081 = vunpack.c.0.s8 %v1080
        %v1082 = vlaneseq
        %v1083 = vshrl.u32 %v1082, 7
        %v1084 = vsub.s32 %v1081, %v1083
        %v1085 = vrot.slane %v1071, %v1084
        %v1086 = vcombine.high %v1062, 0.0
        %v1087 = vcombine.high %v1069, 0.0
        %v1088 = vcombine.high %v1078, 0.0
        %v1089 = vcombine.high %v1085, 0.0
        %v1090 = vcombine.low %v1015, %v1019
        %v1091 = vcombine.high %v1015, %v1019
        %v1093 = vunpack.c.l.s4 1983009808
        %v1094 = vunpack.c.0.s8 %v1093
        %v1095 = vlaneseq
        %v1096 = vshrl.u32 %v1095, 7
        %v1097 = vsub.s32 %v1094, %v1096
        %v1098 = vrot.slane %v1090, %v1097
        %v1100 = vunpack.c.l.s4 1983009808
        %v1101 = vunpack.c.0.s8 %v1100
        %v1102 = vlaneseq
        %v1103 = vshrl.u32 %v1102, 7
        %v1104 = vsub.s32 %v1101, %v1103
        %v1105 = vrot.slane %v1091, %v1104
        %v1106 = vcombine.low %v1017, %v1021
        %v1107 = vcombine.high %v1017, %v1021
        %v1109 = vunpack.c.l.s4 1983009808
        %v1110 = vunpack.c.0.s8 %v1109
        %v1111 = vlaneseq
        %v1112 = vshrl.u32 %v1111, 7
        %v1113 = vsub.s32 %v1110, %v1112
        %v1114 = vrot.slane %v1106, %v1113
        %v1116 = vunpack.c.l.s4 1983009808
        %v1117 = vunpack.c.0.s8 %v1116
        %v1118 = vlaneseq
        %v1119 = vshrl.u32 %v1118, 7
        %v1120 = vsub.s32 %v1117, %v1119
        %v1121 = vrot.slane %v1107, %v1120
        %v1122 = vcombine.low %v1098, %v1114
        %v1123 = vcombine.high %v1098, %v1114
        %v1125 = vunpack.c.l.s4 1934713408
        %v1126 = vunpack.c.0.s8 %v1125
        %v1127 = vlaneseq
        %v1128 = vshrl.u32 %v1127, 7
        %v1129 = vsub.s32 %v1126, %v1128
        %v1130 = vrot.slane %v1122, %v1129
        %v1132 = vunpack.c.l.s4 1934713408
        %v1133 = vunpack.c.0.s8 %v1132
        %v1134 = vlaneseq
        %v1135 = vshrl.u32 %v1134, 7
        %v1136 = vsub.s32 %v1133, %v1135
        %v1137 = vrot.slane %v1123, %v1136
        %v1138 = vcombine.low %v1105, %v1121
        %v1139 = vcombine.high %v1105, %v1121
        %v1141 = vunpack.c.l.s4 1934713408
        %v1142 = vunpack.c.0.s8 %v1141
        %v1143 = vlaneseq
        %v1144 = vshrl.u32 %v1143, 7
        %v1145 = vsub.s32 %v1142, %v1144
        %v1146 = vrot.slane %v1138, %v1145
        %v1148 = vunpack.c.l.s4 1934713408
        %v1149 = vunpack.c.0.s8 %v1148
        %v1150 = vlaneseq
        %v1151 = vshrl.u32 %v1150, 7
        %v1152 = vsub.s32 %v1149, %v1151
        %v1153 = vrot.slane %v1139, %v1152
        %v1154 = vcombine.high %v1130, 0.0
        %v1155 = vcombine.high %v1137, 0.0
        %v1156 = vcombine.high %v1146, 0.0
        %v1157 = vcombine.high %v1153, 0.0
        %1159 = vrot.lane.b32.xlu0 %v1086, 16
        %v1160 = vpop.permute.xlu0 %1159
        %1163 = vrot.lane.b32.xlu0 %v1069, 32
        %v1164 = vpop.permute.xlu0 %1163
        %1167 = vrot.lane.b32.xlu0 %v1087, 48
        %v1168 = vpop.permute.xlu0 %1167
        %1171 = vrot.lane.b32.xlu0 %v1078, 64
        %v1172 = vpop.permute.xlu0 %1171
        %1175 = vrot.lane.b32.xlu0 %v1088, 80
        %v1176 = vpop.permute.xlu0 %1175
        %1179 = vrot.lane.b32.xlu0 %v1085, 96
        %v1180 = vpop.permute.xlu0 %1179
        %1183 = vrot.lane.b32.xlu0 %v1089, 112
        %v1184 = vpop.permute.xlu0 %1183
        %1187 = vrot.lane.b32.xlu0 %v1154, 16
        %v1188 = vpop.permute.xlu0 %1187
        %1191 = vrot.lane.b32.xlu0 %v1137, 32
        %v1192 = vpop.permute.xlu0 %1191
        %1195 = vrot.lane.b32.xlu0 %v1155, 48
        %v1196 = vpop.permute.xlu0 %1195
        %1199 = vrot.lane.b32.xlu0 %v1146, 64
        %v1200 = vpop.permute.xlu0 %1199
        %1203 = vrot.lane.b32.xlu0 %v1156, 80
        %v1204 = vpop.permute.xlu0 %1203
        %1207 = vrot.lane.b32.xlu0 %v1153, 96
        %v1208 = vpop.permute.xlu0 %1207
        %1211 = vrot.lane.b32.xlu0 %v1157, 112
        %v1212 = vpop.permute.xlu0 %1211
        %v1214 = vsel %vm525, %v1062, %v1160
        %v1215 = vsel %vm527, %v1214, %v1164
        %v1216 = vsel %vm529, %v1215, %v1168
        %v1217 = vsel %vm531, %v1216, %v1172
        %v1218 = vsel %vm533, %v1217, %v1176
        %v1219 = vsel %vm535, %v1218, %v1180
        %v1220 = vsel %vm537, %v1219, %v1184
        %v1221 = vsel %vm525, %v1130, %v1188
        %v1222 = vsel %vm527, %v1221, %v1192
        %v1223 = vsel %vm529, %v1222, %v1196
        %v1224 = vsel %vm531, %v1223, %v1200
        %v1225 = vsel %vm533, %v1224, %v1204
        %v1226 = vsel %vm535, %v1225, %v1208
        %v1227 = vsel %vm537, %v1226, %v1212
        %1236 = vrot.lane.b32.xlu0 %v1014, 127
        %v1237 = vpop.permute.xlu0 %1236
        %1238 = vrot.lane.b32.xlu0 %v1015, 127
        %v1239 = vpop.permute.xlu0 %1238
        %1240 = vrot.lane.b32.xlu0 %v1016, 127
        %v1241 = vpop.permute.xlu0 %1240
        %1242 = vrot.lane.b32.xlu0 %v1017, 127
        %v1243 = vpop.permute.xlu0 %1242
        %1244 = vrot.lane.b32.xlu0 %v1018, 127
        %v1245 = vpop.permute.xlu0 %1244
        %1246 = vrot.lane.b32.xlu0 %v1019, 127
        %v1247 = vpop.permute.xlu0 %1246
        %1248 = vrot.lane.b32.xlu0 %v1020, 127
        %v1249 = vpop.permute.xlu0 %1248
        %1250 = vrot.lane.b32.xlu0 %v1021, 127
        %v1251 = vpop.permute.xlu0 %1250
        %v1260 = vcombine.low %v1237, %v1245
        %v1261 = vcombine.high %v1237, %v1245
        %v1263 = vunpack.c.l.s4 1983009808
        %v1264 = vunpack.c.0.s8 %v1263
        %v1265 = vlaneseq
        %v1266 = vshrl.u32 %v1265, 7
        %v1267 = vsub.s32 %v1264, %v1266
        %v1268 = vrot.slane %v1260, %v1267
        %v1270 = vunpack.c.l.s4 1983009808
        %v1271 = vunpack.c.0.s8 %v1270
        %v1272 = vlaneseq
        %v1273 = vshrl.u32 %v1272, 7
        %v1274 = vsub.s32 %v1271, %v1273
        %v1275 = vrot.slane %v1261, %v1274
        %v1276 = vcombine.low %v1241, %v1249
        %v1277 = vcombine.high %v1241, %v1249
        %v1279 = vunpack.c.l.s4 1983009808
        %v1280 = vunpack.c.0.s8 %v1279
        %v1281 = vlaneseq
        %v1282 = vshrl.u32 %v1281, 7
        %v1283 = vsub.s32 %v1280, %v1282
        %v1284 = vrot.slane %v1276, %v1283
        %v1286 = vunpack.c.l.s4 1983009808
        %v1287 = vunpack.c.0.s8 %v1286
        %v1288 = vlaneseq
        %v1289 = vshrl.u32 %v1288, 7
        %v1290 = vsub.s32 %v1287, %v1289
        %v1291 = vrot.slane %v1277, %v1290
        %v1292 = vcombine.low %v1268, %v1284
        %v1293 = vcombine.high %v1268, %v1284
        %v1295 = vunpack.c.l.s4 1934713408
        %v1296 = vunpack.c.0.s8 %v1295
        %v1297 = vlaneseq
        %v1298 = vshrl.u32 %v1297, 7
        %v1299 = vsub.s32 %v1296, %v1298
        %v1300 = vrot.slane %v1292, %v1299
        %v1302 = vunpack.c.l.s4 1934713408
        %v1303 = vunpack.c.0.s8 %v1302
        %v1304 = vlaneseq
        %v1305 = vshrl.u32 %v1304, 7
        %v1306 = vsub.s32 %v1303, %v1305
        %v1307 = vrot.slane %v1293, %v1306
        %v1308 = vcombine.low %v1275, %v1291
        %v1309 = vcombine.high %v1275, %v1291
        %v1311 = vunpack.c.l.s4 1934713408
        %v1312 = vunpack.c.0.s8 %v1311
        %v1313 = vlaneseq
        %v1314 = vshrl.u32 %v1313, 7
        %v1315 = vsub.s32 %v1312, %v1314
        %v1316 = vrot.slane %v1308, %v1315
        %v1318 = vunpack.c.l.s4 1934713408
        %v1319 = vunpack.c.0.s8 %v1318
        %v1320 = vlaneseq
        %v1321 = vshrl.u32 %v1320, 7
        %v1322 = vsub.s32 %v1319, %v1321
        %v1323 = vrot.slane %v1309, %v1322
        %v1324 = vcombine.high %v1300, 0.0
        %v1325 = vcombine.high %v1307, 0.0
        %v1326 = vcombine.high %v1316, 0.0
        %v1327 = vcombine.high %v1323, 0.0
        %v1328 = vcombine.low %v1239, %v1247
        %v1329 = vcombine.high %v1239, %v1247
        %v1331 = vunpack.c.l.s4 1983009808
        %v1332 = vunpack.c.0.s8 %v1331
        %v1333 = vlaneseq
        %v1334 = vshrl.u32 %v1333, 7
        %v1335 = vsub.s32 %v1332, %v1334
        %v1336 = vrot.slane %v1328, %v1335
        %v1338 = vunpack.c.l.s4 1983009808
        %v1339 = vunpack.c.0.s8 %v1338
        %v1340 = vlaneseq
        %v1341 = vshrl.u32 %v1340, 7
        %v1342 = vsub.s32 %v1339, %v1341
        %v1343 = vrot.slane %v1329, %v1342
        %v1344 = vcombine.low %v1243, %v1251
        %v1345 = vcombine.high %v1243, %v1251
        %v1347 = vunpack.c.l.s4 1983009808
        %v1348 = vunpack.c.0.s8 %v1347
        %v1349 = vlaneseq
        %v1350 = vshrl.u32 %v1349, 7
        %v1351 = vsub.s32 %v1348, %v1350
        %v1352 = vrot.slane %v1344, %v1351
        %v1354 = vunpack.c.l.s4 1983009808
        %v1355 = vunpack.c.0.s8 %v1354
        %v1356 = vlaneseq
        %v1357 = vshrl.u32 %v1356, 7
        %v1358 = vsub.s32 %v1355, %v1357
        %v1359 = vrot.slane %v1345, %v1358
        %v1360 = vcombine.low %v1336, %v1352
        %v1361 = vcombine.high %v1336, %v1352
        %v1363 = vunpack.c.l.s4 1934713408
        %v1364 = vunpack.c.0.s8 %v1363
        %v1365 = vlaneseq
        %v1366 = vshrl.u32 %v1365, 7
        %v1367 = vsub.s32 %v1364, %v1366
        %v1368 = vrot.slane %v1360, %v1367
        %v1370 = vunpack.c.l.s4 1934713408
        %v1371 = vunpack.c.0.s8 %v1370
        %v1372 = vlaneseq
        %v1373 = vshrl.u32 %v1372, 7
        %v1374 = vsub.s32 %v1371, %v1373
        %v1375 = vrot.slane %v1361, %v1374
        %v1376 = vcombine.low %v1343, %v1359
        %v1377 = vcombine.high %v1343, %v1359
        %v1379 = vunpack.c.l.s4 1934713408
        %v1380 = vunpack.c.0.s8 %v1379
        %v1381 = vlaneseq
        %v1382 = vshrl.u32 %v1381, 7
        %v1383 = vsub.s32 %v1380, %v1382
        %v1384 = vrot.slane %v1376, %v1383
        %v1386 = vunpack.c.l.s4 1934713408
        %v1387 = vunpack.c.0.s8 %v1386
        %v1388 = vlaneseq
        %v1389 = vshrl.u32 %v1388, 7
        %v1390 = vsub.s32 %v1387, %v1389
        %v1391 = vrot.slane %v1377, %v1390
        %v1392 = vcombine.high %v1368, 0.0
        %v1393 = vcombine.high %v1375, 0.0
        %v1394 = vcombine.high %v1384, 0.0
        %v1395 = vcombine.high %v1391, 0.0
        %1397 = vrot.lane.b32.xlu0 %v1324, 16
        %v1398 = vpop.permute.xlu0 %1397
        %1401 = vrot.lane.b32.xlu0 %v1307, 32
        %v1402 = vpop.permute.xlu0 %1401
        %1405 = vrot.lane.b32.xlu0 %v1325, 48
        %v1406 = vpop.permute.xlu0 %1405
        %1409 = vrot.lane.b32.xlu0 %v1316, 64
        %v1410 = vpop.permute.xlu0 %1409
        %1413 = vrot.lane.b32.xlu0 %v1326, 80
        %v1414 = vpop.permute.xlu0 %1413
        %1417 = vrot.lane.b32.xlu0 %v1323, 96
        %v1418 = vpop.permute.xlu0 %1417
        %1421 = vrot.lane.b32.xlu0 %v1327, 112
        %v1422 = vpop.permute.xlu0 %1421
        %1425 = vrot.lane.b32.xlu0 %v1392, 16
        %v1426 = vpop.permute.xlu0 %1425
        %1429 = vrot.lane.b32.xlu0 %v1375, 32
        %v1430 = vpop.permute.xlu0 %1429
        %1433 = vrot.lane.b32.xlu0 %v1393, 48
        %v1434 = vpop.permute.xlu0 %1433
        %1437 = vrot.lane.b32.xlu0 %v1384, 64
        %v1438 = vpop.permute.xlu0 %1437
        %1441 = vrot.lane.b32.xlu0 %v1394, 80
        %v1442 = vpop.permute.xlu0 %1441
        %1445 = vrot.lane.b32.xlu0 %v1391, 96
        %v1446 = vpop.permute.xlu0 %1445
        %1449 = vrot.lane.b32.xlu0 %v1395, 112
        %v1450 = vpop.permute.xlu0 %1449
        %v1452 = vsel %vm525, %v1300, %v1398
        %v1453 = vsel %vm527, %v1452, %v1402
        %v1454 = vsel %vm529, %v1453, %v1406
        %v1455 = vsel %vm531, %v1454, %v1410
        %v1456 = vsel %vm533, %v1455, %v1414
        %v1457 = vsel %vm535, %v1456, %v1418
        %v1458 = vsel %vm537, %v1457, %v1422
        %v1459 = vsel %vm525, %v1368, %v1426
        %v1460 = vsel %vm527, %v1459, %v1430
        %v1461 = vsel %vm529, %v1460, %v1434
        %v1462 = vsel %vm531, %v1461, %v1438
        %v1463 = vsel %vm533, %v1462, %v1442
        %v1464 = vsel %vm535, %v1463, %v1446
        %v1465 = vsel %vm537, %v1464, %v1450
        %1466 = vrot.lane.b32.xlu0 %v1014, 126
        %v1467 = vpop.permute.xlu0 %1466
        %1468 = vrot.lane.b32.xlu0 %v1015, 126
        %v1469 = vpop.permute.xlu0 %1468
        %1470 = vrot.lane.b32.xlu0 %v1016, 126
        %v1471 = vpop.permute.xlu0 %1470
        %1472 = vrot.lane.b32.xlu0 %v1017, 126
        %v1473 = vpop.permute.xlu0 %1472
        %1474 = vrot.lane.b32.xlu0 %v1018, 126
        %v1475 = vpop.permute.xlu0 %1474
        %1476 = vrot.lane.b32.xlu0 %v1019, 126
        %v1477 = vpop.permute.xlu0 %1476
        %1478 = vrot.lane.b32.xlu0 %v1020, 126
        %v1479 = vpop.permute.xlu0 %1478
        %1480 = vrot.lane.b32.xlu0 %v1021, 126
        %v1481 = vpop.permute.xlu0 %1480
        %v1490 = vcombine.low %v1467, %v1475
        %v1491 = vcombine.high %v1467, %v1475
        %v1493 = vunpack.c.l.s4 1983009808
        %v1494 = vunpack.c.0.s8 %v1493
        %v1495 = vlaneseq
        %v1496 = vshrl.u32 %v1495, 7
        %v1497 = vsub.s32 %v1494, %v1496
        %v1498 = vrot.slane %v1490, %v1497
        %v1500 = vunpack.c.l.s4 1983009808
        %v1501 = vunpack.c.0.s8 %v1500
        %v1502 = vlaneseq
        %v1503 = vshrl.u32 %v1502, 7
        %v1504 = vsub.s32 %v1501, %v1503
        %v1505 = vrot.slane %v1491, %v1504
        %v1506 = vcombine.low %v1471, %v1479
        %v1507 = vcombine.high %v1471, %v1479
        %v1509 = vunpack.c.l.s4 1983009808
        %v1510 = vunpack.c.0.s8 %v1509
        %v1511 = vlaneseq
        %v1512 = vshrl.u32 %v1511, 7
        %v1513 = vsub.s32 %v1510, %v1512
        %v1514 = vrot.slane %v1506, %v1513
        %v1516 = vunpack.c.l.s4 1983009808
        %v1517 = vunpack.c.0.s8 %v1516
        %v1518 = vlaneseq
        %v1519 = vshrl.u32 %v1518, 7
        %v1520 = vsub.s32 %v1517, %v1519
        %v1521 = vrot.slane %v1507, %v1520
        %v1522 = vcombine.low %v1498, %v1514
        %v1523 = vcombine.high %v1498, %v1514
        %v1525 = vunpack.c.l.s4 1934713408
        %v1526 = vunpack.c.0.s8 %v1525
        %v1527 = vlaneseq
        %v1528 = vshrl.u32 %v1527, 7
        %v1529 = vsub.s32 %v1526, %v1528
        %v1530 = vrot.slane %v1522, %v1529
        %v1532 = vunpack.c.l.s4 1934713408
        %v1533 = vunpack.c.0.s8 %v1532
        %v1534 = vlaneseq
        %v1535 = vshrl.u32 %v1534, 7
        %v1536 = vsub.s32 %v1533, %v1535
        %v1537 = vrot.slane %v1523, %v1536
        %v1538 = vcombine.low %v1505, %v1521
        %v1539 = vcombine.high %v1505, %v1521
        %v1541 = vunpack.c.l.s4 1934713408
        %v1542 = vunpack.c.0.s8 %v1541
        %v1543 = vlaneseq
        %v1544 = vshrl.u32 %v1543, 7
        %v1545 = vsub.s32 %v1542, %v1544
        %v1546 = vrot.slane %v1538, %v1545
        %v1548 = vunpack.c.l.s4 1934713408
        %v1549 = vunpack.c.0.s8 %v1548
        %v1550 = vlaneseq
        %v1551 = vshrl.u32 %v1550, 7
        %v1552 = vsub.s32 %v1549, %v1551
        %v1553 = vrot.slane %v1539, %v1552
        %v1554 = vcombine.high %v1530, 0.0
        %v1555 = vcombine.high %v1537, 0.0
        %v1556 = vcombine.high %v1546, 0.0
        %v1557 = vcombine.high %v1553, 0.0
        %v1558 = vcombine.low %v1469, %v1477
        %v1559 = vcombine.high %v1469, %v1477
        %v1561 = vunpack.c.l.s4 1983009808
        %v1562 = vunpack.c.0.s8 %v1561
        %v1563 = vlaneseq
        %v1564 = vshrl.u32 %v1563, 7
        %v1565 = vsub.s32 %v1562, %v1564
        %v1566 = vrot.slane %v1558, %v1565
        %v1568 = vunpack.c.l.s4 1983009808
        %v1569 = vunpack.c.0.s8 %v1568
        %v1570 = vlaneseq
        %v1571 = vshrl.u32 %v1570, 7
        %v1572 = vsub.s32 %v1569, %v1571
        %v1573 = vrot.slane %v1559, %v1572
        %v1574 = vcombine.low %v1473, %v1481
        %v1575 = vcombine.high %v1473, %v1481
        %v1577 = vunpack.c.l.s4 1983009808
        %v1578 = vunpack.c.0.s8 %v1577
        %v1579 = vlaneseq
        %v1580 = vshrl.u32 %v1579, 7
        %v1581 = vsub.s32 %v1578, %v1580
        %v1582 = vrot.slane %v1574, %v1581
        %v1584 = vunpack.c.l.s4 1983009808
        %v1585 = vunpack.c.0.s8 %v1584
        %v1586 = vlaneseq
        %v1587 = vshrl.u32 %v1586, 7
        %v1588 = vsub.s32 %v1585, %v1587
        %v1589 = vrot.slane %v1575, %v1588
        %v1590 = vcombine.low %v1566, %v1582
        %v1591 = vcombine.high %v1566, %v1582
        %v1593 = vunpack.c.l.s4 1934713408
        %v1594 = vunpack.c.0.s8 %v1593
        %v1595 = vlaneseq
        %v1596 = vshrl.u32 %v1595, 7
        %v1597 = vsub.s32 %v1594, %v1596
        %v1598 = vrot.slane %v1590, %v1597
        %v1600 = vunpack.c.l.s4 1934713408
        %v1601 = vunpack.c.0.s8 %v1600
        %v1602 = vlaneseq
        %v1603 = vshrl.u32 %v1602, 7
        %v1604 = vsub.s32 %v1601, %v1603
        %v1605 = vrot.slane %v1591, %v1604
        %v1606 = vcombine.low %v1573, %v1589
        %v1607 = vcombine.high %v1573, %v1589
        %v1609 = vunpack.c.l.s4 1934713408
        %v1610 = vunpack.c.0.s8 %v1609
        %v1611 = vlaneseq
        %v1612 = vshrl.u32 %v1611, 7
        %v1613 = vsub.s32 %v1610, %v1612
        %v1614 = vrot.slane %v1606, %v1613
        %v1616 = vunpack.c.l.s4 1934713408
        %v1617 = vunpack.c.0.s8 %v1616
        %v1618 = vlaneseq
        %v1619 = vshrl.u32 %v1618, 7
        %v1620 = vsub.s32 %v1617, %v1619
        %v1621 = vrot.slane %v1607, %v1620
        %v1622 = vcombine.high %v1598, 0.0
        %v1623 = vcombine.high %v1605, 0.0
        %v1624 = vcombine.high %v1614, 0.0
        %v1625 = vcombine.high %v1621, 0.0
        %1627 = vrot.lane.b32.xlu0 %v1554, 16
        %v1628 = vpop.permute.xlu0 %1627
        %1631 = vrot.lane.b32.xlu0 %v1537, 32
        %v1632 = vpop.permute.xlu0 %1631
        %1635 = vrot.lane.b32.xlu0 %v1555, 48
        %v1636 = vpop.permute.xlu0 %1635
        %1639 = vrot.lane.b32.xlu0 %v1546, 64
        %v1640 = vpop.permute.xlu0 %1639
        %1643 = vrot.lane.b32.xlu0 %v1556, 80
        %v1644 = vpop.permute.xlu0 %1643
        %1647 = vrot.lane.b32.xlu0 %v1553, 96
        %v1648 = vpop.permute.xlu0 %1647
        %1651 = vrot.lane.b32.xlu0 %v1557, 112
        %v1652 = vpop.permute.xlu0 %1651
        %1655 = vrot.lane.b32.xlu0 %v1622, 16
        %v1656 = vpop.permute.xlu0 %1655
        %1659 = vrot.lane.b32.xlu0 %v1605, 32
        %v1660 = vpop.permute.xlu0 %1659
        %1663 = vrot.lane.b32.xlu0 %v1623, 48
        %v1664 = vpop.permute.xlu0 %1663
        %1667 = vrot.lane.b32.xlu0 %v1614, 64
        %v1668 = vpop.permute.xlu0 %1667
        %1671 = vrot.lane.b32.xlu0 %v1624, 80
        %v1672 = vpop.permute.xlu0 %1671
        %1675 = vrot.lane.b32.xlu0 %v1621, 96
        %v1676 = vpop.permute.xlu0 %1675
        %1679 = vrot.lane.b32.xlu0 %v1625, 112
        %v1680 = vpop.permute.xlu0 %1679
        %v1682 = vsel %vm525, %v1530, %v1628
        %v1683 = vsel %vm527, %v1682, %v1632
        %v1684 = vsel %vm529, %v1683, %v1636
        %v1685 = vsel %vm531, %v1684, %v1640
        %v1686 = vsel %vm533, %v1685, %v1644
        %v1687 = vsel %vm535, %v1686, %v1648
        %v1688 = vsel %vm537, %v1687, %v1652
        %v1689 = vsel %vm525, %v1598, %v1656
        %v1690 = vsel %vm527, %v1689, %v1660
        %v1691 = vsel %vm529, %v1690, %v1664
        %v1692 = vsel %vm531, %v1691, %v1668
        %v1693 = vsel %vm533, %v1692, %v1672
        %v1694 = vsel %vm535, %v1693, %v1676
        %v1695 = vsel %vm537, %v1694, %v1680
        %v1696 = vld [vmem:[#allocation2 + $0x2] sm:$0xff]
        %v1697 = vld [vmem:[#allocation2 + $0xa] sm:$0xff]
        %v1698 = vld [vmem:[#allocation2 + $0x1a] sm:$0xff]
        %v1699 = vld [vmem:[#allocation2 + $0x22] sm:$0xff]
        %v1700 = vld [vmem:[#allocation2 + $0x32] sm:$0xff]
        %v1701 = vld [vmem:[#allocation2 + $0x3a] sm:$0xff]
        %v1702 = vld [vmem:[#allocation2 + $0x4a] sm:$0xff]
        %v1703 = vld [vmem:[#allocation2 + $0x52] sm:$0xff]
        %v1704 = vcombine.low %v1696, %v1700
        %v1705 = vcombine.high %v1696, %v1700
        %v1707 = vunpack.c.l.s4 1983009808
        %v1708 = vunpack.c.0.s8 %v1707
        %v1709 = vlaneseq
        %v1710 = vshrl.u32 %v1709, 7
        %v1711 = vsub.s32 %v1708, %v1710
        %v1712 = vrot.slane %v1704, %v1711
        %v1714 = vunpack.c.l.s4 1983009808
        %v1715 = vunpack.c.0.s8 %v1714
        %v1716 = vlaneseq
        %v1717 = vshrl.u32 %v1716, 7
        %v1718 = vsub.s32 %v1715, %v1717
        %v1719 = vrot.slane %v1705, %v1718
        %v1720 = vcombine.low %v1698, %v1702
        %v1721 = vcombine.high %v1698, %v1702
        %v1723 = vunpack.c.l.s4 1983009808
        %v1724 = vunpack.c.0.s8 %v1723
        %v1725 = vlaneseq
        %v1726 = vshrl.u32 %v1725, 7
        %v1727 = vsub.s32 %v1724, %v1726
        %v1728 = vrot.slane %v1720, %v1727
        %v1730 = vunpack.c.l.s4 1983009808
        %v1731 = vunpack.c.0.s8 %v1730
        %v1732 = vlaneseq
        %v1733 = vshrl.u32 %v1732, 7
        %v1734 = vsub.s32 %v1731, %v1733
        %v1735 = vrot.slane %v1721, %v1734
        %v1736 = vcombine.low %v1712, %v1728
        %v1737 = vcombine.high %v1712, %v1728
        %v1739 = vunpack.c.l.s4 1934713408
        %v1740 = vunpack.c.0.s8 %v1739
        %v1741 = vlaneseq
        %v1742 = vshrl.u32 %v1741, 7
        %v1743 = vsub.s32 %v1740, %v1742
        %v1744 = vrot.slane %v1736, %v1743
        %v1746 = vunpack.c.l.s4 1934713408
        %v1747 = vunpack.c.0.s8 %v1746
        %v1748 = vlaneseq
        %v1749 = vshrl.u32 %v1748, 7
        %v1750 = vsub.s32 %v1747, %v1749
        %v1751 = vrot.slane %v1737, %v1750
        %v1752 = vcombine.low %v1719, %v1735
        %v1753 = vcombine.high %v1719, %v1735
        %v1755 = vunpack.c.l.s4 1934713408
        %v1756 = vunpack.c.0.s8 %v1755
        %v1757 = vlaneseq
        %v1758 = vshrl.u32 %v1757, 7
        %v1759 = vsub.s32 %v1756, %v1758
        %v1760 = vrot.slane %v1752, %v1759
        %v1762 = vunpack.c.l.s4 1934713408
        %v1763 = vunpack.c.0.s8 %v1762
        %v1764 = vlaneseq
        %v1765 = vshrl.u32 %v1764, 7
        %v1766 = vsub.s32 %v1763, %v1765
        %v1767 = vrot.slane %v1753, %v1766
        %v1768 = vcombine.high %v1744, 0.0
        %v1769 = vcombine.high %v1751, 0.0
        %v1770 = vcombine.high %v1760, 0.0
        %v1771 = vcombine.high %v1767, 0.0
        %v1772 = vcombine.low %v1697, %v1701
        %v1773 = vcombine.high %v1697, %v1701
        %v1775 = vunpack.c.l.s4 1983009808
        %v1776 = vunpack.c.0.s8 %v1775
        %v1777 = vlaneseq
        %v1778 = vshrl.u32 %v1777, 7
        %v1779 = vsub.s32 %v1776, %v1778
        %v1780 = vrot.slane %v1772, %v1779
        %v1782 = vunpack.c.l.s4 1983009808
        %v1783 = vunpack.c.0.s8 %v1782
        %v1784 = vlaneseq
        %v1785 = vshrl.u32 %v1784, 7
        %v1786 = vsub.s32 %v1783, %v1785
        %v1787 = vrot.slane %v1773, %v1786
        %v1788 = vcombine.low %v1699, %v1703
        %v1789 = vcombine.high %v1699, %v1703
        %v1791 = vunpack.c.l.s4 1983009808
        %v1792 = vunpack.c.0.s8 %v1791
        %v1793 = vlaneseq
        %v1794 = vshrl.u32 %v1793, 7
        %v1795 = vsub.s32 %v1792, %v1794
        %v1796 = vrot.slane %v1788, %v1795
        %v1798 = vunpack.c.l.s4 1983009808
        %v1799 = vunpack.c.0.s8 %v1798
        %v1800 = vlaneseq
        %v1801 = vshrl.u32 %v1800, 7
        %v1802 = vsub.s32 %v1799, %v1801
        %v1803 = vrot.slane %v1789, %v1802
        %v1804 = vcombine.low %v1780, %v1796
        %v1805 = vcombine.high %v1780, %v1796
        %v1807 = vunpack.c.l.s4 1934713408
        %v1808 = vunpack.c.0.s8 %v1807
        %v1809 = vlaneseq
        %v1810 = vshrl.u32 %v1809, 7
        %v1811 = vsub.s32 %v1808, %v1810
        %v1812 = vrot.slane %v1804, %v1811
        %v1814 = vunpack.c.l.s4 1934713408
        %v1815 = vunpack.c.0.s8 %v1814
        %v1816 = vlaneseq
        %v1817 = vshrl.u32 %v1816, 7
        %v1818 = vsub.s32 %v1815, %v1817
        %v1819 = vrot.slane %v1805, %v1818
        %v1820 = vcombine.low %v1787, %v1803
        %v1821 = vcombine.high %v1787, %v1803
        %v1823 = vunpack.c.l.s4 1934713408
        %v1824 = vunpack.c.0.s8 %v1823
        %v1825 = vlaneseq
        %v1826 = vshrl.u32 %v1825, 7
        %v1827 = vsub.s32 %v1824, %v1826
        %v1828 = vrot.slane %v1820, %v1827
        %v1830 = vunpack.c.l.s4 1934713408
        %v1831 = vunpack.c.0.s8 %v1830
        %v1832 = vlaneseq
        %v1833 = vshrl.u32 %v1832, 7
        %v1834 = vsub.s32 %v1831, %v1833
        %v1835 = vrot.slane %v1821, %v1834
        %v1836 = vcombine.high %v1812, 0.0
        %v1837 = vcombine.high %v1819, 0.0
        %v1838 = vcombine.high %v1828, 0.0
        %v1839 = vcombine.high %v1835, 0.0
        %1841 = vrot.lane.b32.xlu0 %v1768, 16
        %v1842 = vpop.permute.xlu0 %1841
        %1845 = vrot.lane.b32.xlu0 %v1751, 32
        %v1846 = vpop.permute.xlu0 %1845
        %1849 = vrot.lane.b32.xlu0 %v1769, 48
        %v1850 = vpop.permute.xlu0 %1849
        %1853 = vrot.lane.b32.xlu0 %v1760, 64
        %v1854 = vpop.permute.xlu0 %1853
        %1857 = vrot.lane.b32.xlu0 %v1770, 80
        %v1858 = vpop.permute.xlu0 %1857
        %1861 = vrot.lane.b32.xlu0 %v1767, 96
        %v1862 = vpop.permute.xlu0 %1861
        %1865 = vrot.lane.b32.xlu0 %v1771, 112
        %v1866 = vpop.permute.xlu0 %1865
        %1869 = vrot.lane.b32.xlu0 %v1836, 16
        %v1870 = vpop.permute.xlu0 %1869
        %1873 = vrot.lane.b32.xlu0 %v1819, 32
        %v1874 = vpop.permute.xlu0 %1873
        %1877 = vrot.lane.b32.xlu0 %v1837, 48
        %v1878 = vpop.permute.xlu0 %1877
        %1881 = vrot.lane.b32.xlu0 %v1828, 64
        %v1882 = vpop.permute.xlu0 %1881
        %1885 = vrot.lane.b32.xlu0 %v1838, 80
        %v1886 = vpop.permute.xlu0 %1885
        %1889 = vrot.lane.b32.xlu0 %v1835, 96
        %v1890 = vpop.permute.xlu0 %1889
        %1893 = vrot.lane.b32.xlu0 %v1839, 112
        %v1894 = vpop.permute.xlu0 %1893
        %v1896 = vsel %vm525, %v1744, %v1842
        %v1897 = vsel %vm527, %v1896, %v1846
        %v1898 = vsel %vm529, %v1897, %v1850
        %v1899 = vsel %vm531, %v1898, %v1854
        %v1900 = vsel %vm533, %v1899, %v1858
        %v1901 = vsel %vm535, %v1900, %v1862
        %v1902 = vsel %vm537, %v1901, %v1866
        %v1903 = vsel %vm525, %v1812, %v1870
        %v1904 = vsel %vm527, %v1903, %v1874
        %v1905 = vsel %vm529, %v1904, %v1878
        %v1906 = vsel %vm531, %v1905, %v1882
        %v1907 = vsel %vm533, %v1906, %v1886
        %v1908 = vsel %vm535, %v1907, %v1890
        %v1909 = vsel %vm537, %v1908, %v1894
        %1918 = vrot.lane.b32.xlu0 %v1696, 127
        %v1919 = vpop.permute.xlu0 %1918
        %1920 = vrot.lane.b32.xlu0 %v1697, 127
        %v1921 = vpop.permute.xlu0 %1920
        %1922 = vrot.lane.b32.xlu0 %v1698, 127
        %v1923 = vpop.permute.xlu0 %1922
        %1924 = vrot.lane.b32.xlu0 %v1699, 127
        %v1925 = vpop.permute.xlu0 %1924
        %1926 = vrot.lane.b32.xlu0 %v1700, 127
        %v1927 = vpop.permute.xlu0 %1926
        %1928 = vrot.lane.b32.xlu0 %v1701, 127
        %v1929 = vpop.permute.xlu0 %1928
        %1930 = vrot.lane.b32.xlu0 %v1702, 127
        %v1931 = vpop.permute.xlu0 %1930
        %1932 = vrot.lane.b32.xlu0 %v1703, 127
        %v1933 = vpop.permute.xlu0 %1932
        %v1942 = vcombine.low %v1919, %v1927
        %v1943 = vcombine.high %v1919, %v1927
        %v1945 = vunpack.c.l.s4 1983009808
        %v1946 = vunpack.c.0.s8 %v1945
        %v1947 = vlaneseq
        %v1948 = vshrl.u32 %v1947, 7
        %v1949 = vsub.s32 %v1946, %v1948
        %v1950 = vrot.slane %v1942, %v1949
        %v1952 = vunpack.c.l.s4 1983009808
        %v1953 = vunpack.c.0.s8 %v1952
        %v1954 = vlaneseq
        %v1955 = vshrl.u32 %v1954, 7
        %v1956 = vsub.s32 %v1953, %v1955
        %v1957 = vrot.slane %v1943, %v1956
        %v1958 = vcombine.low %v1923, %v1931
        %v1959 = vcombine.high %v1923, %v1931
        %v1961 = vunpack.c.l.s4 1983009808
        %v1962 = vunpack.c.0.s8 %v1961
        %v1963 = vlaneseq
        %v1964 = vshrl.u32 %v1963, 7
        %v1965 = vsub.s32 %v1962, %v1964
        %v1966 = vrot.slane %v1958, %v1965
        %v1968 = vunpack.c.l.s4 1983009808
        %v1969 = vunpack.c.0.s8 %v1968
        %v1970 = vlaneseq
        %v1971 = vshrl.u32 %v1970, 7
        %v1972 = vsub.s32 %v1969, %v1971
        %v1973 = vrot.slane %v1959, %v1972
        %v1974 = vcombine.low %v1950, %v1966
        %v1975 = vcombine.high %v1950, %v1966
        %v1977 = vunpack.c.l.s4 1934713408
        %v1978 = vunpack.c.0.s8 %v1977
        %v1979 = vlaneseq
        %v1980 = vshrl.u32 %v1979, 7
        %v1981 = vsub.s32 %v1978, %v1980
        %v1982 = vrot.slane %v1974, %v1981
        %v1984 = vunpack.c.l.s4 1934713408
        %v1985 = vunpack.c.0.s8 %v1984
        %v1986 = vlaneseq
        %v1987 = vshrl.u32 %v1986, 7
        %v1988 = vsub.s32 %v1985, %v1987
        %v1989 = vrot.slane %v1975, %v1988
        %v1990 = vcombine.low %v1957, %v1973
        %v1991 = vcombine.high %v1957, %v1973
        %v1993 = vunpack.c.l.s4 1934713408
        %v1994 = vunpack.c.0.s8 %v1993
        %v1995 = vlaneseq
        %v1996 = vshrl.u32 %v1995, 7
        %v1997 = vsub.s32 %v1994, %v1996
        %v1998 = vrot.slane %v1990, %v1997
        %v2000 = vunpack.c.l.s4 1934713408
        %v2001 = vunpack.c.0.s8 %v2000
        %v2002 = vlaneseq
        %v2003 = vshrl.u32 %v2002, 7
        %v2004 = vsub.s32 %v2001, %v2003
        %v2005 = vrot.slane %v1991, %v2004
        %v2006 = vcombine.high %v1982, 0.0
        %v2007 = vcombine.high %v1989, 0.0
        %v2008 = vcombine.high %v1998, 0.0
        %v2009 = vcombine.high %v2005, 0.0
        %v2010 = vcombine.low %v1921, %v1929
        %v2011 = vcombine.high %v1921, %v1929
        %v2013 = vunpack.c.l.s4 1983009808
        %v2014 = vunpack.c.0.s8 %v2013
        %v2015 = vlaneseq
        %v2016 = vshrl.u32 %v2015, 7
        %v2017 = vsub.s32 %v2014, %v2016
        %v2018 = vrot.slane %v2010, %v2017
        %v2020 = vunpack.c.l.s4 1983009808
        %v2021 = vunpack.c.0.s8 %v2020
        %v2022 = vlaneseq
        %v2023 = vshrl.u32 %v2022, 7
        %v2024 = vsub.s32 %v2021, %v2023
        %v2025 = vrot.slane %v2011, %v2024
        %v2026 = vcombine.low %v1925, %v1933
        %v2027 = vcombine.high %v1925, %v1933
        %v2029 = vunpack.c.l.s4 1983009808
        %v2030 = vunpack.c.0.s8 %v2029
        %v2031 = vlaneseq
        %v2032 = vshrl.u32 %v2031, 7
        %v2033 = vsub.s32 %v2030, %v2032
        %v2034 = vrot.slane %v2026, %v2033
        %v2036 = vunpack.c.l.s4 1983009808
        %v2037 = vunpack.c.0.s8 %v2036
        %v2038 = vlaneseq
        %v2039 = vshrl.u32 %v2038, 7
        %v2040 = vsub.s32 %v2037, %v2039
        %v2041 = vrot.slane %v2027, %v2040
        %v2042 = vcombine.low %v2018, %v2034
        %v2043 = vcombine.high %v2018, %v2034
        %v2045 = vunpack.c.l.s4 1934713408
        %v2046 = vunpack.c.0.s8 %v2045
        %v2047 = vlaneseq
        %v2048 = vshrl.u32 %v2047, 7
        %v2049 = vsub.s32 %v2046, %v2048
        %v2050 = vrot.slane %v2042, %v2049
        %v2052 = vunpack.c.l.s4 1934713408
        %v2053 = vunpack.c.0.s8 %v2052
        %v2054 = vlaneseq
        %v2055 = vshrl.u32 %v2054, 7
        %v2056 = vsub.s32 %v2053, %v2055
        %v2057 = vrot.slane %v2043, %v2056
        %v2058 = vcombine.low %v2025, %v2041
        %v2059 = vcombine.high %v2025, %v2041
        %v2061 = vunpack.c.l.s4 1934713408
        %v2062 = vunpack.c.0.s8 %v2061
        %v2063 = vlaneseq
        %v2064 = vshrl.u32 %v2063, 7
        %v2065 = vsub.s32 %v2062, %v2064
        %v2066 = vrot.slane %v2058, %v2065
        %v2068 = vunpack.c.l.s4 1934713408
        %v2069 = vunpack.c.0.s8 %v2068
        %v2070 = vlaneseq
        %v2071 = vshrl.u32 %v2070, 7
        %v2072 = vsub.s32 %v2069, %v2071
        %v2073 = vrot.slane %v2059, %v2072
        %v2074 = vcombine.high %v2050, 0.0
        %v2075 = vcombine.high %v2057, 0.0
        %v2076 = vcombine.high %v2066, 0.0
        %v2077 = vcombine.high %v2073, 0.0
        %2079 = vrot.lane.b32.xlu0 %v2006, 16
        %v2080 = vpop.permute.xlu0 %2079
        %2083 = vrot.lane.b32.xlu0 %v1989, 32
        %v2084 = vpop.permute.xlu0 %2083
        %2087 = vrot.lane.b32.xlu0 %v2007, 48
        %v2088 = vpop.permute.xlu0 %2087
        %2091 = vrot.lane.b32.xlu0 %v1998, 64
        %v2092 = vpop.permute.xlu0 %2091
        %2095 = vrot.lane.b32.xlu0 %v2008, 80
        %v2096 = vpop.permute.xlu0 %2095
        %2099 = vrot.lane.b32.xlu0 %v2005, 96
        %v2100 = vpop.permute.xlu0 %2099
        %2103 = vrot.lane.b32.xlu0 %v2009, 112
        %v2104 = vpop.permute.xlu0 %2103
        %2107 = vrot.lane.b32.xlu0 %v2074, 16
        %v2108 = vpop.permute.xlu0 %2107
        %2111 = vrot.lane.b32.xlu0 %v2057, 32
        %v2112 = vpop.permute.xlu0 %2111
        %2115 = vrot.lane.b32.xlu0 %v2075, 48
        %v2116 = vpop.permute.xlu0 %2115
        %2119 = vrot.lane.b32.xlu0 %v2066, 64
        %v2120 = vpop.permute.xlu0 %2119
        %2123 = vrot.lane.b32.xlu0 %v2076, 80
        %v2124 = vpop.permute.xlu0 %2123
        %2127 = vrot.lane.b32.xlu0 %v2073, 96
        %v2128 = vpop.permute.xlu0 %2127
        %2131 = vrot.lane.b32.xlu0 %v2077, 112
        %v2132 = vpop.permute.xlu0 %2131
        %v2134 = vsel %vm525, %v1982, %v2080
        %v2135 = vsel %vm527, %v2134, %v2084
        %v2136 = vsel %vm529, %v2135, %v2088
        %v2137 = vsel %vm531, %v2136, %v2092
        %v2138 = vsel %vm533, %v2137, %v2096
        %v2139 = vsel %vm535, %v2138, %v2100
        %v2140 = vsel %vm537, %v2139, %v2104
        %v2141 = vsel %vm525, %v2050, %v2108
        %v2142 = vsel %vm527, %v2141, %v2112
        %v2143 = vsel %vm529, %v2142, %v2116
        %v2144 = vsel %vm531, %v2143, %v2120
        %v2145 = vsel %vm533, %v2144, %v2124
        %v2146 = vsel %vm535, %v2145, %v2128
        %v2147 = vsel %vm537, %v2146, %v2132
        %2148 = vrot.lane.b32.xlu0 %v1696, 126
        %v2149 = vpop.permute.xlu0 %2148
        %2150 = vrot.lane.b32.xlu0 %v1697, 126
        %v2151 = vpop.permute.xlu0 %2150
        %2152 = vrot.lane.b32.xlu0 %v1698, 126
        %v2153 = vpop.permute.xlu0 %2152
        %2154 = vrot.lane.b32.xlu0 %v1699, 126
        %v2155 = vpop.permute.xlu0 %2154
        %2156 = vrot.lane.b32.xlu0 %v1700, 126
        %v2157 = vpop.permute.xlu0 %2156
        %2158 = vrot.lane.b32.xlu0 %v1701, 126
        %v2159 = vpop.permute.xlu0 %2158
        %2160 = vrot.lane.b32.xlu0 %v1702, 126
        %v2161 = vpop.permute.xlu0 %2160
        %2162 = vrot.lane.b32.xlu0 %v1703, 126
        %v2163 = vpop.permute.xlu0 %2162
        %v2172 = vcombine.low %v2149, %v2157
        %v2173 = vcombine.high %v2149, %v2157
        %v2175 = vunpack.c.l.s4 1983009808
        %v2176 = vunpack.c.0.s8 %v2175
        %v2177 = vlaneseq
        %v2178 = vshrl.u32 %v2177, 7
        %v2179 = vsub.s32 %v2176, %v2178
        %v2180 = vrot.slane %v2172, %v2179
        %v2182 = vunpack.c.l.s4 1983009808
        %v2183 = vunpack.c.0.s8 %v2182
        %v2184 = vlaneseq
        %v2185 = vshrl.u32 %v2184, 7
        %v2186 = vsub.s32 %v2183, %v2185
        %v2187 = vrot.slane %v2173, %v2186
        %v2188 = vcombine.low %v2153, %v2161
        %v2189 = vcombine.high %v2153, %v2161
        %v2191 = vunpack.c.l.s4 1983009808
        %v2192 = vunpack.c.0.s8 %v2191
        %v2193 = vlaneseq
        %v2194 = vshrl.u32 %v2193, 7
        %v2195 = vsub.s32 %v2192, %v2194
        %v2196 = vrot.slane %v2188, %v2195
        %v2198 = vunpack.c.l.s4 1983009808
        %v2199 = vunpack.c.0.s8 %v2198
        %v2200 = vlaneseq
        %v2201 = vshrl.u32 %v2200, 7
        %v2202 = vsub.s32 %v2199, %v2201
        %v2203 = vrot.slane %v2189, %v2202
        %v2204 = vcombine.low %v2180, %v2196
        %v2205 = vcombine.high %v2180, %v2196
        %v2207 = vunpack.c.l.s4 1934713408
        %v2208 = vunpack.c.0.s8 %v2207
        %v2209 = vlaneseq
        %v2210 = vshrl.u32 %v2209, 7
        %v2211 = vsub.s32 %v2208, %v2210
        %v2212 = vrot.slane %v2204, %v2211
        %v2214 = vunpack.c.l.s4 1934713408
        %v2215 = vunpack.c.0.s8 %v2214
        %v2216 = vlaneseq
        %v2217 = vshrl.u32 %v2216, 7
        %v2218 = vsub.s32 %v2215, %v2217
        %v2219 = vrot.slane %v2205, %v2218
        %v2220 = vcombine.low %v2187, %v2203
        %v2221 = vcombine.high %v2187, %v2203
        %v2223 = vunpack.c.l.s4 1934713408
        %v2224 = vunpack.c.0.s8 %v2223
        %v2225 = vlaneseq
        %v2226 = vshrl.u32 %v2225, 7
        %v2227 = vsub.s32 %v2224, %v2226
        %v2228 = vrot.slane %v2220, %v2227
        %v2230 = vunpack.c.l.s4 1934713408
        %v2231 = vunpack.c.0.s8 %v2230
        %v2232 = vlaneseq
        %v2233 = vshrl.u32 %v2232, 7
        %v2234 = vsub.s32 %v2231, %v2233
        %v2235 = vrot.slane %v2221, %v2234
        %v2236 = vcombine.high %v2212, 0.0
        %v2237 = vcombine.high %v2219, 0.0
        %v2238 = vcombine.high %v2228, 0.0
        %v2239 = vcombine.high %v2235, 0.0
        %v2240 = vcombine.low %v2151, %v2159
        %v2241 = vcombine.high %v2151, %v2159
        %v2243 = vunpack.c.l.s4 1983009808
        %v2244 = vunpack.c.0.s8 %v2243
        %v2245 = vlaneseq
        %v2246 = vshrl.u32 %v2245, 7
        %v2247 = vsub.s32 %v2244, %v2246
        %v2248 = vrot.slane %v2240, %v2247
        %v2250 = vunpack.c.l.s4 1983009808
        %v2251 = vunpack.c.0.s8 %v2250
        %v2252 = vlaneseq
        %v2253 = vshrl.u32 %v2252, 7
        %v2254 = vsub.s32 %v2251, %v2253
        %v2255 = vrot.slane %v2241, %v2254
        %v2256 = vcombine.low %v2155, %v2163
        %v2257 = vcombine.high %v2155, %v2163
        %v2259 = vunpack.c.l.s4 1983009808
        %v2260 = vunpack.c.0.s8 %v2259
        %v2261 = vlaneseq
        %v2262 = vshrl.u32 %v2261, 7
        %v2263 = vsub.s32 %v2260, %v2262
        %v2264 = vrot.slane %v2256, %v2263
        %v2266 = vunpack.c.l.s4 1983009808
        %v2267 = vunpack.c.0.s8 %v2266
        %v2268 = vlaneseq
        %v2269 = vshrl.u32 %v2268, 7
        %v2270 = vsub.s32 %v2267, %v2269
        %v2271 = vrot.slane %v2257, %v2270
        %v2272 = vcombine.low %v2248, %v2264
        %v2273 = vcombine.high %v2248, %v2264
        %v2275 = vunpack.c.l.s4 1934713408
        %v2276 = vunpack.c.0.s8 %v2275
        %v2277 = vlaneseq
        %v2278 = vshrl.u32 %v2277, 7
        %v2279 = vsub.s32 %v2276, %v2278
        %v2280 = vrot.slane %v2272, %v2279
        %v2282 = vunpack.c.l.s4 1934713408
        %v2283 = vunpack.c.0.s8 %v2282
        %v2284 = vlaneseq
        %v2285 = vshrl.u32 %v2284, 7
        %v2286 = vsub.s32 %v2283, %v2285
        %v2287 = vrot.slane %v2273, %v2286
        %v2288 = vcombine.low %v2255, %v2271
        %v2289 = vcombine.high %v2255, %v2271
        %v2291 = vunpack.c.l.s4 1934713408
        %v2292 = vunpack.c.0.s8 %v2291
        %v2293 = vlaneseq
        %v2294 = vshrl.u32 %v2293, 7
        %v2295 = vsub.s32 %v2292, %v2294
        %v2296 = vrot.slane %v2288, %v2295
        %v2298 = vunpack.c.l.s4 1934713408
        %v2299 = vunpack.c.0.s8 %v2298
        %v2300 = vlaneseq
        %v2301 = vshrl.u32 %v2300, 7
        %v2302 = vsub.s32 %v2299, %v2301
        %v2303 = vrot.slane %v2289, %v2302
        %v2304 = vcombine.high %v2280, 0.0
        %v2305 = vcombine.high %v2287, 0.0
        %v2306 = vcombine.high %v2296, 0.0
        %v2307 = vcombine.high %v2303, 0.0
        %2309 = vrot.lane.b32.xlu0 %v2236, 16
        %v2310 = vpop.permute.xlu0 %2309
        %2313 = vrot.lane.b32.xlu0 %v2219, 32
        %v2314 = vpop.permute.xlu0 %2313
        %2317 = vrot.lane.b32.xlu0 %v2237, 48
        %v2318 = vpop.permute.xlu0 %2317
        %2321 = vrot.lane.b32.xlu0 %v2228, 64
        %v2322 = vpop.permute.xlu0 %2321
        %2325 = vrot.lane.b32.xlu0 %v2238, 80
        %v2326 = vpop.permute.xlu0 %2325
        %2329 = vrot.lane.b32.xlu0 %v2235, 96
        %v2330 = vpop.permute.xlu0 %2329
        %2333 = vrot.lane.b32.xlu0 %v2239, 112
        %v2334 = vpop.permute.xlu0 %2333
        %2337 = vrot.lane.b32.xlu0 %v2304, 16
        %v2338 = vpop.permute.xlu0 %2337
        %2341 = vrot.lane.b32.xlu0 %v2287, 32
        %v2342 = vpop.permute.xlu0 %2341
        %2345 = vrot.lane.b32.xlu0 %v2305, 48
        %v2346 = vpop.permute.xlu0 %2345
        %2349 = vrot.lane.b32.xlu0 %v2296, 64
        %v2350 = vpop.permute.xlu0 %2349
        %2353 = vrot.lane.b32.xlu0 %v2306, 80
        %v2354 = vpop.permute.xlu0 %2353
        %2357 = vrot.lane.b32.xlu0 %v2303, 96
        %v2358 = vpop.permute.xlu0 %2357
        %2361 = vrot.lane.b32.xlu0 %v2307, 112
        %v2362 = vpop.permute.xlu0 %2361
        %v2364 = vsel %vm525, %v2212, %v2310
        %v2365 = vsel %vm527, %v2364, %v2314
        %v2366 = vsel %vm529, %v2365, %v2318
        %v2367 = vsel %vm531, %v2366, %v2322
        %v2368 = vsel %vm533, %v2367, %v2326
        %v2369 = vsel %vm535, %v2368, %v2330
        %v2370 = vsel %vm537, %v2369, %v2334
        %v2371 = vsel %vm525, %v2280, %v2338
        %v2372 = vsel %vm527, %v2371, %v2342
        %v2373 = vsel %vm529, %v2372, %v2346
        %v2374 = vsel %vm531, %v2373, %v2350
        %v2375 = vsel %vm533, %v2374, %v2354
        %v2376 = vsel %vm535, %v2375, %v2358
        %v2377 = vsel %vm537, %v2376, %v2362
        %v2380 = vrot.slane %v776, 4
        %v2381 = vrot.slane %v783, 4
        %v2386 = vrot.slane %v1220, 4
        %v2387 = vrot.slane %v1227, 4
        %v2392 = vrot.slane %v1688, 4
        %v2393 = vrot.slane %v1695, 4
        %v2398 = vrot.slane %v2140, 4
        %v2399 = vrot.slane %v2147, 4
        %vm2402 = vcmask 1043456
        %v2403 = vsel %vm2402, %v538, %v2380
        %v2404 = vsel %vm2402, %v545, %v2381
        %v2405 = vsel %vm2402, %v1006, %v2386
        %v2406 = vsel %vm2402, %v1013, %v2387
        %v2407 = vsel %vm2402, %v1458, %v2392
        %v2408 = vsel %vm2402, %v1465, %v2393
        %v2409 = vsel %vm2402, %v1902, %v2398
        %v2410 = vsel %vm2402, %v1909, %v2399
        %v2411 = vld [vmem:[%s1] sm:$0xff]
        %vm2412 = vcmask 293888
        %v2414 = vsel %vm2412, %v2411, 0
        %v2417 = vsel %vm2402, %v2370, 0
        %v2420 = vsel %vm2402, %v2377, 0
        %2422 = vmatprep.subr.mxu0 %v2404
        %2423 = vmatpush1.msra.mxu0 %v2403
        %2424 = vmatprep.subr.mxu0 %v2406
        %2425 = vmatpush1.msra.mxu0 %v2405
        %2426 = vmatprep.subr.mxu0 %v2408
        %2427 = vmatpush1.msra.mxu0 %v2407
        %2428 = vmatprep.subr.mxu0 %v2410
        %2429 = vmatpush1.msra.mxu0 %v2409
        %2430 = vmatprep.subr.mxu0 %v2420
        %2431 = vmatpush1.msra.mxu0 %v2417
        %2432 = vmatprep.subr.mxu0 0.0
        %2433 = vmatpush1.msra.mxu0 0.0
        %2434 = vmatprep.subr.mxu0 0.0
        %2435 = vmatpush1.msra.mxu0 0.0
        %2436 = vmatprep.subr.mxu0 0.0
        %2437 = vmatpush1.msra.mxu0 0.0
        %2438 = vmatprep.subr.mxu0 0.0
        %2439 = vmatpush1.msra.mxu0 0.0
        %2440 = vmatprep.subr.mxu0 0.0
        %2441 = vmatpush1.msra.mxu0 0.0
        %2442 = vmatprep.subr.mxu0 0.0
        %2443 = vmatpush1.msra.mxu0 0.0
        %2444 = vmatprep.subr.mxu0 0.0
        %2445 = vmatpush1.msra.mxu0 0.0
        %2446 = vmatprep.subr.mxu0 0.0
        %2447 = vmatpush1.msra.mxu0 0.0
        %2448 = vmatprep.subr.mxu0 0.0
        %2449 = vmatpush1.msra.mxu0 0.0
        %2450 = vmatprep.subr.mxu0 0.0
        %2451 = vmatpush1.msra.mxu0 0.0
        %2452 = vmatprep.subr.mxu0 0.0
        %2453 = vmatpush1.msra.mxu0 0.0
        %2454 = vmatprep.subr.mxu0 0.0
        %2455 = vmatpush1.msra.mxu0 0.0
        %2456 = vmatprep.subr.mxu0 0.0
        %2457 = vmatpush1.msra.mxu0 0.0
        %2458 = vmatprep.subr.mxu0 0.0
        %2459 = vmatpush1.msra.mxu0 0.0
        %2460 = vmatprep.subr.mxu0 0.0
        %2461 = vmatpush1.msra.mxu0 0.0
        %2462 = vmatprep.subr.mxu0 0.0
        %2463 = vmatpush1.msra.mxu0 0.0
        %2464 = vmatprep.subr.mxu0 0.0
        %2465 = vmatpush1.msra.mxu0 0.0
        %2466 = vmatprep.subr.mxu0 0.0
        %2467 = vmatpush1.msra.mxu0 0.0
        %2468 = vmatprep.subr.mxu0 0.0
        %2469 = vmatpush1.msra.mxu0 0.0
        %2470 = vmatprep.subr.mxu0 0.0
        %2471 = vmatpush1.msra.mxu0 0.0
        %2472 = vmatprep.subr.mxu0 0.0
        %2473 = vmatpush1.msra.mxu0 0.0
        %2474 = vmatprep.subr.mxu0 0.0
        %2475 = vmatpush1.msra.mxu0 0.0
        %2476 = vmatprep.subr.mxu0 0.0
        %2477 = vmatpush1.msra.mxu0 0.0
        %2478 = vmatprep.subr.mxu0 0.0
        %2479 = vmatpush1.msra.mxu0 0.0
        %2480 = vmatprep.subr.mxu0 0.0
        %2481 = vmatpush1.msra.mxu0 0.0
        %2482 = vmatprep.subr.mxu0 0.0
        %2483 = vmatpush1.msra.mxu0 0.0
        %2484 = vmatprep.subr.mxu0 0.0
        %2485 = vmatpush1.msra.mxu0 0.0
        %2486 = vmatprep.mubr.f32.mxu0 0.0
        %2487 = vmatmul.mubr.f32.gmra.mrb[0].mxu0 %v2414
        %v2488 = vpop.f32.mrb[0].mxu0
        %v2489 = vadd.f32 0.0, %v2488
        %v2490 = vpop.f32.mrb[0].mxu0
        %v2491 = vadd.f32 0.0, %v2490
        %2492 = vdwg.mxu0
        %2493 = vst [vmem:[%s230] sm:$0xff] %v2489
        %2494 = vst [vmem:[%s230 + $0x8] sm:$0xff] %v2491
        %v2495 = vadd.f32 %v2489, %v2491
        %2496 = vadd.xlane.f32.xlu0 %v2495
        %v2497 = vpop.xlane.xlu0 %2496
        %v2498 = vadd.f32 %v2497, 0.0
        %v2499 = vmul.f32 %v2489, %v2489
        %v2500 = vmul.f32 %v2491, %v2491
        %v2501 = vadd.f32 %v2499, %v2500
        %2502 = vadd.xlane.f32.xlu0 %v2501
        %v2503 = vpop.xlane.xlu0 %2502
        %v2504 = vadd.f32 %v2503, 0.0
        %2505 = vst.msk [vmem:[%s234] sm:$0xff] %vm248, %v2498
        %2506 = vst.msk [vmem:[%s238] sm:$0xff] %vm248, %v2504
        %p2507 = scmp.lt.s32.totalorder %s19, 1
        %s2508 = scalar_select %p2507, %s19, 1
        %s2509 = smul.addr %s2508, 2
        %s2510 = smul.addr %s2509, 8
        %s2511 = scalar_lea.vmem %s2, %s2510
        %p2512 = scmp.lt.s32.totalorder %s19, 1
        %s2513 = scalar_select %p2512, %s19, 1
        %s2514 = smul.addr %s2513, 8
        %s2515 = scalar_lea.vmem %s3, %s2514
        %p2516 = scmp.lt.s32.totalorder %s19, 1
        %s2517 = scalar_select %p2516, %s19, 1
        %s2518 = smul.addr %s2517, 8
        %s2519 = scalar_lea.vmem %s4, %s2518
        // Predicated region
        $region33: #{conv_bn_relu_forward.2} parent=27 // pred_check
          %p2520 = pneg %p84
        $region34: #{conv_bn_relu_forward.2} parent=27 // pred_check_branch
          %2522 = sbr.rel (%p2520) target = $region36
        $region35: #{conv_bn_relu_forward.2} parent=27 // pred_region
          _
        $region36: #{conv_bn_relu_forward.2} parent=27 // pred_fallthru
          _
        // Predicated region
        $region37: #{conv_bn_relu_forward.2} parent=27 // pred_check
          %p2523 = pneg %p110
        $region38: #{conv_bn_relu_forward.2} parent=27 // pred_check_branch
          %2525 = sbr.rel (%p2523) target = $region40
        $region39: #{conv_bn_relu_forward.2} parent=27 // pred_region
          _
        $region40: #{conv_bn_relu_forward.2} parent=27 // pred_fallthru
          _
        // Predicated region
        $region41: #{conv_bn_relu_forward.2} parent=27 // pred_check
          %p2526 = pneg %p136
        $region42: #{conv_bn_relu_forward.2} parent=27 // pred_check_branch
          %2528 = sbr.rel (%p2526) target = $region44
        $region43: #{conv_bn_relu_forward.2} parent=27 // pred_region
          _
        $region44: #{conv_bn_relu_forward.2} parent=27 // pred_fallthru
          _
      $region28: #{conv_bn_relu_forward.2} parent=5 // pred_fallthru
        _
      %p2529 = scmp.le.s32.totalorder 2, %s14
      // Predicated region
      $region45: #{conv_bn_relu_forward.2} parent=5 // pred_check
        %p2530 = pneg %p2529
      $region46: #{conv_bn_relu_forward.2} parent=5 // pred_check_branch
        %2532 = sbr.rel (%p2530) target = $region48
      $region47: #{conv_bn_relu_forward.2} parent=5 // pred_region
        %s2533 = ssub.s32 %s14, 2
        // Predicated region
        $region49: #{conv_bn_relu_forward.2} parent=47 // pred_check
          %p2534 = pneg %p90
        $region50: #{conv_bn_relu_forward.2} parent=47 // pred_check_branch
          %2536 = sbr.rel (%p2534) target = $region52
        $region51: #{conv_bn_relu_forward.2} parent=47 // pred_region
          %p2537 = scmp.lt.s32.totalorder %s20, 1
          %s2538 = scalar_select %p2537, %s20, 1
          %s2539 = smul.addr %s2538, 2
          %s2540 = smul.addr %s2539, 8
          %s2541 = scalar_lea.vmem %s2, %s2540
        $region52: #{conv_bn_relu_forward.2} parent=47 // pred_fallthru
          _
        // Predicated region
        $region53: #{conv_bn_relu_forward.2} parent=47 // pred_check
          %p2542 = pneg %p116
        $region54: #{conv_bn_relu_forward.2} parent=47 // pred_check_branch
          %2544 = sbr.rel (%p2542) target = $region56
        $region55: #{conv_bn_relu_forward.2} parent=47 // pred_region
          %p2545 = scmp.lt.s32.totalorder %s20, 1
          %s2546 = scalar_select %p2545, %s20, 1
          %s2547 = smul.addr %s2546, 8
          %s2548 = scalar_lea.vmem %s3, %s2547
        $region56: #{conv_bn_relu_forward.2} parent=47 // pred_fallthru
          _
        // Predicated region
        $region57: #{conv_bn_relu_forward.2} parent=47 // pred_check
          %p2549 = pneg %p142
        $region58: #{conv_bn_relu_forward.2} parent=47 // pred_check_branch
          %2551 = sbr.rel (%p2549) target = $region60
        $region59: #{conv_bn_relu_forward.2} parent=47 // pred_region
          %p2552 = scmp.lt.s32.totalorder %s20, 1
          %s2553 = scalar_select %p2552, %s20, 1
          %s2554 = smul.addr %s2553, 8
          %s2555 = scalar_lea.vmem %s4, %s2554
        $region60: #{conv_bn_relu_forward.2} parent=47 // pred_fallthru
          _
      $region48: #{conv_bn_relu_forward.2} parent=5 // pred_fallthru
        _
    $region6: #{conv_bn_relu_forward.2} parent=1 // loop_footer
      %s18 = sadd.s32 1, %s14
    $region7: #{conv_bn_relu_forward.2} parent=1 // loop_footer_branch
      %13 = sbr.rel target = $region3
    $region8: #{conv_bn_relu_forward.2} parent=1 // loop_exit
      _
    %2556 = vsyncpa [#allocation4], 1
    %s2557 = scalar_lea.sflag [#allocation4], 1
    %2558 = vsyncpa %s2557, 1

</llo_original>
